<compile_context>
chip_gen: v6e
topology: v6e:2x2x1
jax: 0.10.0
libtpu: 0.0.40
codegen_flags: <defaults>
</compile_context>

<pallas_src>
import functools

import jax
import jax.numpy as jnp
from jax import lax
from jax.experimental import pallas as pl
from jax.experimental.pallas import tpu as pltpu


# ------------------------------ fused multi-layer LSTM kernel ------------------------------
def make_fused_lstm_kernel(num_layers, T, B, H):
    def kernel(*refs):
        # refs = [x_ref,
        #         (w_ih_t, w_hh_t, b) * num_layers,
        #         o_ref,
        #         gin_scr, seq_scr]
        # x_ref:   (T*B, I)   time-major, flattened (row t*B+b == x[b, t])
        # w_ih_t:  (Din, 4H)  transposed, gate-permuted PyTorch weight_ih
        # w_hh_t:  (H, 4H)    transposed, gate-permuted PyTorch weight_hh
        # b:       (1, 4H)    gate-permuted (bias_ih + bias_hh)
        # o_ref:   (T*B, H)   time-major flattened output of the last layer
        # gin_scr: (T*B, 4H)  hoisted input-projection gates
        # seq_scr: (T*B, H)   inter-layer activation (VMEM resident)
        x_ref = refs[0]
        o_ref = refs[1 + 3 * num_layers]
        gin_scr = refs[2 + 3 * num_layers]
        seq_scr = refs[3 + 3 * num_layers]

        for layer in range(num_layers):
            w_ih_ref = refs[1 + 3 * layer]
            w_hh_ref = refs[2 + 3 * layer]
            b_ref = refs[3 + 3 * layer]

            # ---- hoisted input projection: ONE big MXU matmul, bias folded in ----
            inp = x_ref[...] if layer == 0 else seq_scr[...]          # (T*B, Din)
            gin_scr[...] = (
                jnp.dot(inp, w_ih_ref[...], preferred_element_type=jnp.float32)
                + b_ref[...]
            )                                                          # (T*B, 4H)

            whh = w_hh_ref[...]          # load once; resident across the recurrence
            # last layer writes straight to the output block
            out_dst = o_ref if layer == num_layers - 1 else seq_scr

            # ---- recurrence: only h @ W_hh left on the serial path; fully unrolled ----
            h = None
            c = None
            for t in range(T):                                         # static unroll
                if t == 0:
                    # h == c == 0 at t == 0: skip the MXU matmul entirely
                    gates = gin_scr[0:B, :]                            # (B, 4H)
                else:
                    gates = gin_scr[t * B:(t + 1) * B, :] + jnp.dot(
                        h, whh, preferred_element_type=jnp.float32)    # (B, 4H)

                # gate column order (pre-permuted at prep time): [i, f, o, g]
                sig = jax.nn.sigmoid(gates[:, 0:3 * H])                # one EUP slab
                i_g = sig[:, 0 * H:1 * H]
                f_g = sig[:, 1 * H:2 * H]
                o_g = sig[:, 2 * H:3 * H]
                g_g = jnp.tanh(gates[:, 3 * H:4 * H])

                c = (i_g * g_g) if t == 0 else (f_g * c + i_g * g_g)
                h = o_g * jnp.tanh(c)
                out_dst[t * B:(t + 1) * B, :] = h

    return kernel


# --------------------------------------- wrapper ---------------------------------------
@functools.partial(jax.jit, static_argnames=("hidden_size", "num_layers"))
def clinical_processor_forward(kernel_params, x, *, hidden_size, num_layers):
    # x: (B, T, input_size) -- batch_first, same as the PyTorch module's forward input
    B, T, I = x.shape
    H = hidden_size

    # one cheap relayout to time-major, flattened so row (t*B + b) == x[b, t]
    x_tm = jnp.transpose(x.astype(jnp.float32), (1, 0, 2)).reshape(T * B, I)

    args = [x_tm]
    for lp in kernel_params["lstm"]:
        args += [lp["w_ih_t"], lp["w_hh_t"], lp["b"]]

    kernel = make_fused_lstm_kernel(num_layers, T, B, H)
    out_flat = pl.pallas_call(
        kernel,
        out_shape=jax.ShapeDtypeStruct((T * B, H), jnp.float32),
        in_specs=[pl.BlockSpec(memory_space=pltpu.MemorySpace.VMEM)] * len(args),
        out_specs=pl.BlockSpec(memory_space=pltpu.MemorySpace.VMEM),
        scratch_shapes=[
            pltpu.VMEM((T * B, 4 * H), jnp.float32),   # hoisted gates
            pltpu.VMEM((T * B, H), jnp.float32),       # inter-layer activations
        ],
    )(*args)

    # (T*B, H) time-major -> (B, T, H) batch_first
    return jnp.transpose(out_flat.reshape(T, B, H), (1, 0, 2))


# ----------------------------------- parameter handling -----------------------------------
def init_torch_params(key, input_size, hidden_size, num_layers):
    # Canonical PyTorch nn.LSTM layout/init: weight_ih (4H, din), weight_hh (4H, H),
    # bias_ih / bias_hh (4H,), gate row order [i, f, g, o].
    H = hidden_size
    bound = 1.0 / (H ** 0.5)
    keys = jax.random.split(key, 4 * num_layers)
    layers = []
    for l in range(num_layers):
        din = input_size if l == 0 else H
        k = keys[4 * l:4 * l + 4]
        layers.append({
            "w_ih": jax.random.uniform(k[0], (4 * H, din), jnp.float32, -bound, bound),
            "w_hh": jax.random.uniform(k[1], (4 * H, H), jnp.float32, -bound, bound),
            "b_ih": jax.random.uniform(k[2], (4 * H,), jnp.float32, -bound, bound),
            "b_hh": jax.random.uniform(k[3], (4 * H,), jnp.float32, -bound, bound),
        })
    return {"lstm": layers}


def prepare_kernel_params(torch_params, hidden_size):
    # One-time conversion to kernel-ready storage:
    #   * gate blocks re-ordered [i, f, g, o] -> [i, f, o, g] (sigmoid gates contiguous)
    #   * weights transposed to (Din, 4H) / (H, 4H)
    #   * biases pre-summed and reshaped to (1, 4H)
    H = hidden_size
    perm = jnp.concatenate([
        jnp.arange(0 * H, 1 * H),   # i
        jnp.arange(1 * H, 2 * H),   # f
        jnp.arange(3 * H, 4 * H),   # o
        jnp.arange(2 * H, 3 * H),   # g
    ])
    layers = []
    for lp in torch_params["lstm"]:
        layers.append({
            "w_ih_t": jnp.transpose(lp["w_ih"][perm, :]),            # (din, 4H)
            "w_hh_t": jnp.transpose(lp["w_hh"][perm, :]),            # (H, 4H)
            "b": (lp["b_ih"] + lp["b_hh"])[perm].reshape(1, 4 * H),  # (1, 4H)
        })
    return {"lstm": layers}


# --------------------------- pure-JAX reference (PyTorch semantics) ---------------------------
def reference_forward(torch_params, x, hidden_size):
    B, T, I = x.shape
    H = hidden_size
    h_seq = jnp.transpose(x.astype(jnp.float32), (1, 0, 2))   # (T, B, I)
    for lp in torch_params["lstm"]:
        w_ih_t = jnp.transpose(lp["w_ih"])
        w_hh_t = jnp.transpose(lp["w_hh"])
        b = (lp["b_ih"] + lp["b_hh"]).reshape(1, 4 * H)

        def step(carry, x_t, w_ih_t=w_ih_t, w_hh_t=w_hh_t, b=b):
            h, c = carry
            gates = x_t @ w_ih_t + h @ w_hh_t + b
            i_g = jax.nn.sigmoid(gates[:, 0 * H:1 * H])
            f_g = jax.nn.sigmoid(gates[:, 1 * H:2 * H])
            g_g = jnp.tanh(gates[:, 2 * H:3 * H])
            o_g = jax.nn.sigmoid(gates[:, 3 * H:4 * H])
            c_n = f_g * c + i_g * g_g
            h_n = o_g * jnp.tanh(c_n)
            return (h_n, c_n), h_n

        init = (jnp.zeros((B, H), jnp.float32), jnp.zeros((B, H), jnp.float32))
        _, h_seq = lax.scan(step, init, h_seq)
    return jnp.transpose(h_seq, (1, 0, 2))


if __name__ == "__main__":
    B, T = 2, 8
    input_size, hidden_size, num_layers = 4, 32, 2

    key = jax.random.PRNGKey(0)
    kp, kx = jax.random.split(key)
    torch_params = init_torch_params(kp, input_size, hidden_size, num_layers)
    kernel_params = prepare_kernel_params(torch_params, hidden_size)
    x = jax.random.normal(kx, (B, T, input_size), jnp.float32)

    out = clinical_processor_forward(kernel_params, x, hidden_size=hidden_size,
                                     num_layers=num_layers)
    out = jax.block_until_ready(out)

    ref = reference_forward(torch_params, x, hidden_size)
    assert out.shape == (B, T, hidden_size), out.shape
    err = float(jnp.max(jnp.abs(out - ref)))
    assert err < 1e-4, err

    print("KERNEL_OK")
</pallas_src>

<mosaic_0001>
module attributes {stable_mosaic.version = 11 : i64} {
  func.func @kernel(%arg0: memref<16x4xf32, #tpu.memory_space<vmem>>, %arg1: memref<4x128xf32, #tpu.memory_space<vmem>>, %arg2: memref<32x128xf32, #tpu.memory_space<vmem>>, %arg3: memref<1x128xf32, #tpu.memory_space<vmem>>, %arg4: memref<32x128xf32, #tpu.memory_space<vmem>>, %arg5: memref<32x128xf32, #tpu.memory_space<vmem>>, %arg6: memref<1x128xf32, #tpu.memory_space<vmem>>, %arg7: memref<16x32xf32, #tpu.memory_space<vmem>>, %arg8: memref<16x128xf32, #tpu.memory_space<vmem>>, %arg9: memref<16x32xf32, #tpu.memory_space<vmem>>) attributes {dimension_semantics = [], scalar_prefetch = 0 : i64, scratch_operands = 2 : i64, tpu.core_type = #tpu.core_type<tc>} {
    %c0 = arith.constant 0 : index
    %c0_0 = arith.constant 0 : index
    %0 = vector.load %arg0[%c0, %c0_0] : memref<16x4xf32, #tpu.memory_space<vmem>>, vector<16x4xf32>
    %c0_1 = arith.constant 0 : index
    %c0_2 = arith.constant 0 : index
    %1 = vector.load %arg1[%c0_1, %c0_2] : memref<4x128xf32, #tpu.memory_space<vmem>>, vector<4x128xf32>
    %cst = arith.constant dense<0.000000e+00> : vector<16x128xf32>
    %2 = tpu.matmul %0, %1, %cst {dimension_numbers = #tpu.dot_dimension_numbers<[1], [0], [0], [1], [0, 0, 1, 1], [], []>} : vector<16x4xf32>, vector<4x128xf32>, vector<16x128xf32> -> vector<16x128xf32>
    %c0_3 = arith.constant 0 : index
    %c0_4 = arith.constant 0 : index
    %3 = vector.load %arg3[%c0_3, %c0_4] : memref<1x128xf32, #tpu.memory_space<vmem>>, vector<1x128xf32>
    %4 = vector.broadcast %3 : vector<1x128xf32> to vector<16x128xf32>
    %5 = arith.addf %2, %4 : vector<16x128xf32>
    %c0_5 = arith.constant 0 : index
    %c0_6 = arith.constant 0 : index
    %6 = vector.load %arg8[%c0_5, %c0_6] : memref<16x128xf32, #tpu.memory_space<vmem>>, vector<16x128xf32>
    tpu.vector_store %arg8[%c0_5, %c0_6], %5 {strides = array<i32>} : memref<16x128xf32, #tpu.memory_space<vmem>>, vector<16x128xf32>,
    %c0_7 = arith.constant 0 : index
    %c0_8 = arith.constant 0 : index
    %7 = vector.load %arg2[%c0_7, %c0_8] : memref<32x128xf32, #tpu.memory_space<vmem>>, vector<32x128xf32>
    %c0_9 = arith.constant 0 : index
    %c0_10 = arith.constant 0 : index
    %8 = vector.load %arg8[%c0_9, %c0_10] : memref<16x128xf32, #tpu.memory_space<vmem>>, vector<2x128xf32>
    %9 = vector.extract_strided_slice %8 {offsets = [0, 0], sizes = [2, 96], strides = [1, 1]} : vector<2x128xf32> to vector<2x96xf32>
    %10 = arith.negf %9 : vector<2x96xf32>
    %11 = math.exp %10 : vector<2x96xf32>
    %cst_11 = arith.constant 1.000000e+00 : f32
    %12 = vector.broadcast %cst_11 : f32 to vector<2x96xf32>
    %13 = arith.addf %12, %11 : vector<2x96xf32>
    %14 = arith.divf %12, %13 : vector<2x96xf32>
    %15 = vector.extract_strided_slice %14 {offsets = [0, 0], sizes = [2, 32], strides = [1, 1]} : vector<2x96xf32> to vector<2x32xf32>
    %16 = vector.extract_strided_slice %14 {offsets = [0, 64], sizes = [2, 32], strides = [1, 1]} : vector<2x96xf32> to vector<2x32xf32>
    %17 = vector.extract_strided_slice %8 {offsets = [0, 96], sizes = [2, 32], strides = [1, 1]} : vector<2x128xf32> to vector<2x32xf32>
    %18 = math.tanh %17 : vector<2x32xf32>
    %19 = arith.mulf %15, %18 : vector<2x32xf32>
    %20 = math.tanh %19 : vector<2x32xf32>
    %21 = arith.mulf %16, %20 : vector<2x32xf32>
    %c0_12 = arith.constant 0 : index
    %c0_13 = arith.constant 0 : index
    %22 = vector.load %arg9[%c0_12, %c0_13] : memref<16x32xf32, #tpu.memory_space<vmem>>, vector<2x32xf32>
    tpu.vector_store %arg9[%c0_12, %c0_13], %21 {strides = array<i32>} : memref<16x32xf32, #tpu.memory_space<vmem>>, vector<2x32xf32>,
    %c2 = arith.constant 2 : index
    %c0_14 = arith.constant 0 : index
    %23 = vector.load %arg8[%c2, %c0_14] : memref<16x128xf32, #tpu.memory_space<vmem>>, vector<2x128xf32>
    %cst_15 = arith.constant dense<0.000000e+00> : vector<2x128xf32>
    %24 = tpu.matmul %21, %7, %cst_15 {dimension_numbers = #tpu.dot_dimension_numbers<[1], [0], [0], [1], [0, 0, 1, 1], [], []>} : vector<2x32xf32>, vector<32x128xf32>, vector<2x128xf32> -> vector<2x128xf32>
    %25 = arith.addf %23, %24 : vector<2x128xf32>
    %26 = vector.extract_strided_slice %25 {offsets = [0, 0], sizes = [2, 96], strides = [1, 1]} : vector<2x128xf32> to vector<2x96xf32>
    %27 = arith.negf %26 : vector<2x96xf32>
    %28 = math.exp %27 : vector<2x96xf32>
    %cst_16 = arith.constant 1.000000e+00 : f32
    %29 = vector.broadcast %cst_16 : f32 to vector<2x96xf32>
    %30 = arith.addf %29, %28 : vector<2x96xf32>
    %31 = arith.divf %29, %30 : vector<2x96xf32>
    %32 = vector.extract_strided_slice %31 {offsets = [0, 0], sizes = [2, 32], strides = [1, 1]} : vector<2x96xf32> to vector<2x32xf32>
    %33 = vector.extract_strided_slice %31 {offsets = [0, 32], sizes = [2, 32], strides = [1, 1]} : vector<2x96xf32> to vector<2x32xf32>
    %34 = vector.extract_strided_slice %31 {offsets = [0, 64], sizes = [2, 32], strides = [1, 1]} : vector<2x96xf32> to vector<2x32xf32>
    %35 = vector.extract_strided_slice %25 {offsets = [0, 96], sizes = [2, 32], strides = [1, 1]} : vector<2x128xf32> to vector<2x32xf32>
    %36 = math.tanh %35 : vector<2x32xf32>
    %37 = arith.mulf %33, %19 : vector<2x32xf32>
    %38 = arith.mulf %32, %36 : vector<2x32xf32>
    %39 = arith.addf %37, %38 : vector<2x32xf32>
    %40 = math.tanh %39 : vector<2x32xf32>
    %41 = arith.mulf %34, %40 : vector<2x32xf32>
    %c2_17 = arith.constant 2 : index
    %c0_18 = arith.constant 0 : index
    %42 = vector.load %arg9[%c2_17, %c0_18] : memref<16x32xf32, #tpu.memory_space<vmem>>, vector<2x32xf32>
    tpu.vector_store %arg9[%c2_17, %c0_18], %41 {strides = array<i32>} : memref<16x32xf32, #tpu.memory_space<vmem>>, vector<2x32xf32>,
    %c4 = arith.constant 4 : index
    %c0_19 = arith.constant 0 : index
    %43 = vector.load %arg8[%c4, %c0_19] : memref<16x128xf32, #tpu.memory_space<vmem>>, vector<2x128xf32>
    %cst_20 = arith.constant dense<0.000000e+00> : vector<2x128xf32>
    %44 = tpu.matmul %41, %7, %cst_20 {dimension_numbers = #tpu.dot_dimension_numbers<[1], [0], [0], [1], [0, 0, 1, 1], [], []>} : vector<2x32xf32>, vector<32x128xf32>, vector<2x128xf32> -> vector<2x128xf32>
    %45 = arith.addf %43, %44 : vector<2x128xf32>
    %46 = vector.extract_strided_slice %45 {offsets = [0, 0], sizes = [2, 96], strides = [1, 1]} : vector<2x128xf32> to vector<2x96xf32>
    %47 = arith.negf %46 : vector<2x96xf32>
    %48 = math.exp %47 : vector<2x96xf32>
    %cst_21 = arith.constant 1.000000e+00 : f32
    %49 = vector.broadcast %cst_21 : f32 to vector<2x96xf32>
    %50 = arith.addf %49, %48 : vector<2x96xf32>
    %51 = arith.divf %49, %50 : vector<2x96xf32>
    %52 = vector.extract_strided_slice %51 {offsets = [0, 0], sizes = [2, 32], strides = [1, 1]} : vector<2x96xf32> to vector<2x32xf32>
    %53 = vector.extract_strided_slice %51 {offsets = [0, 32], sizes = [2, 32], strides = [1, 1]} : vector<2x96xf32> to vector<2x32xf32>
    %54 = vector.extract_strided_slice %51 {offsets = [0, 64], sizes = [2, 32], strides = [1, 1]} : vector<2x96xf32> to vector<2x32xf32>
    %55 = vector.extract_strided_slice %45 {offsets = [0, 96], sizes = [2, 32], strides = [1, 1]} : vector<2x128xf32> to vector<2x32xf32>
    %56 = math.tanh %55 : vector<2x32xf32>
    %57 = arith.mulf %53, %39 : vector<2x32xf32>
    %58 = arith.mulf %52, %56 : vector<2x32xf32>
    %59 = arith.addf %57, %58 : vector<2x32xf32>
    %60 = math.tanh %59 : vector<2x32xf32>
    %61 = arith.mulf %54, %60 : vector<2x32xf32>
    %c4_22 = arith.constant 4 : index
    %c0_23 = arith.constant 0 : index
    %62 = vector.load %arg9[%c4_22, %c0_23] : memref<16x32xf32, #tpu.memory_space<vmem>>, vector<2x32xf32>
    tpu.vector_store %arg9[%c4_22, %c0_23], %61 {strides = array<i32>} : memref<16x32xf32, #tpu.memory_space<vmem>>, vector<2x32xf32>,
    %c6 = arith.constant 6 : index
    %c0_24 = arith.constant 0 : index
    %63 = vector.load %arg8[%c6, %c0_24] : memref<16x128xf32, #tpu.memory_space<vmem>>, vector<2x128xf32>
    %cst_25 = arith.constant dense<0.000000e+00> : vector<2x128xf32>
    %64 = tpu.matmul %61, %7, %cst_25 {dimension_numbers = #tpu.dot_dimension_numbers<[1], [0], [0], [1], [0, 0, 1, 1], [], []>} : vector<2x32xf32>, vector<32x128xf32>, vector<2x128xf32> -> vector<2x128xf32>
    %65 = arith.addf %63, %64 : vector<2x128xf32>
    %66 = vector.extract_strided_slice %65 {offsets = [0, 0], sizes = [2, 96], strides = [1, 1]} : vector<2x128xf32> to vector<2x96xf32>
    %67 = arith.negf %66 : vector<2x96xf32>
    %68 = math.exp %67 : vector<2x96xf32>
    %cst_26 = arith.constant 1.000000e+00 : f32
    %69 = vector.broadcast %cst_26 : f32 to vector<2x96xf32>
    %70 = arith.addf %69, %68 : vector<2x96xf32>
    %71 = arith.divf %69, %70 : vector<2x96xf32>
    %72 = vector.extract_strided_slice %71 {offsets = [0, 0], sizes = [2, 32], strides = [1, 1]} : vector<2x96xf32> to vector<2x32xf32>
    %73 = vector.extract_strided_slice %71 {offsets = [0, 32], sizes = [2, 32], strides = [1, 1]} : vector<2x96xf32> to vector<2x32xf32>
    %74 = vector.extract_strided_slice %71 {offsets = [0, 64], sizes = [2, 32], strides = [1, 1]} : vector<2x96xf32> to vector<2x32xf32>
    %75 = vector.extract_strided_slice %65 {offsets = [0, 96], sizes = [2, 32], strides = [1, 1]} : vector<2x128xf32> to vector<2x32xf32>
    %76 = math.tanh %75 : vector<2x32xf32>
    %77 = arith.mulf %73, %59 : vector<2x32xf32>
    %78 = arith.mulf %72, %76 : vector<2x32xf32>
    %79 = arith.addf %77, %78 : vector<2x32xf32>
    %80 = math.tanh %79 : vector<2x32xf32>
    %81 = arith.mulf %74, %80 : vector<2x32xf32>
    %c6_27 = arith.constant 6 : index
    %c0_28 = arith.constant 0 : index
    %82 = vector.load %arg9[%c6_27, %c0_28] : memref<16x32xf32, #tpu.memory_space<vmem>>, vector<2x32xf32>
    tpu.vector_store %arg9[%c6_27, %c0_28], %81 {strides = array<i32>} : memref<16x32xf32, #tpu.memory_space<vmem>>, vector<2x32xf32>,
    %c8 = arith.constant 8 : index
    %c0_29 = arith.constant 0 : index
    %83 = vector.load %arg8[%c8, %c0_29] : memref<16x128xf32, #tpu.memory_space<vmem>>, vector<2x128xf32>
    %cst_30 = arith.constant dense<0.000000e+00> : vector<2x128xf32>
    %84 = tpu.matmul %81, %7, %cst_30 {dimension_numbers = #tpu.dot_dimension_numbers<[1], [0], [0], [1], [0, 0, 1, 1], [], []>} : vector<2x32xf32>, vector<32x128xf32>, vector<2x128xf32> -> vector<2x128xf32>
    %85 = arith.addf %83, %84 : vector<2x128xf32>
    %86 = vector.extract_strided_slice %85 {offsets = [0, 0], sizes = [2, 96], strides = [1, 1]} : vector<2x128xf32> to vector<2x96xf32>
    %87 = arith.negf %86 : vector<2x96xf32>
    %88 = math.exp %87 : vector<2x96xf32>
    %cst_31 = arith.constant 1.000000e+00 : f32
    %89 = vector.broadcast %cst_31 : f32 to vector<2x96xf32>
    %90 = arith.addf %89, %88 : vector<2x96xf32>
    %91 = arith.divf %89, %90 : vector<2x96xf32>
    %92 = vector.extract_strided_slice %91 {offsets = [0, 0], sizes = [2, 32], strides = [1, 1]} : vector<2x96xf32> to vector<2x32xf32>
    %93 = vector.extract_strided_slice %91 {offsets = [0, 32], sizes = [2, 32], strides = [1, 1]} : vector<2x96xf32> to vector<2x32xf32>
    %94 = vector.extract_strided_slice %91 {offsets = [0, 64], sizes = [2, 32], strides = [1, 1]} : vector<2x96xf32> to vector<2x32xf32>
    %95 = vector.extract_strided_slice %85 {offsets = [0, 96], sizes = [2, 32], strides = [1, 1]} : vector<2x128xf32> to vector<2x32xf32>
    %96 = math.tanh %95 : vector<2x32xf32>
    %97 = arith.mulf %93, %79 : vector<2x32xf32>
    %98 = arith.mulf %92, %96 : vector<2x32xf32>
    %99 = arith.addf %97, %98 : vector<2x32xf32>
    %100 = math.tanh %99 : vector<2x32xf32>
    %101 = arith.mulf %94, %100 : vector<2x32xf32>
    %c8_32 = arith.constant 8 : index
    %c0_33 = arith.constant 0 : index
    %102 = vector.load %arg9[%c8_32, %c0_33] : memref<16x32xf32, #tpu.memory_space<vmem>>, vector<2x32xf32>
    tpu.vector_store %arg9[%c8_32, %c0_33], %101 {strides = array<i32>} : memref<16x32xf32, #tpu.memory_space<vmem>>, vector<2x32xf32>,
    %c10 = arith.constant 10 : index
    %c0_34 = arith.constant 0 : index
    %103 = vector.load %arg8[%c10, %c0_34] : memref<16x128xf32, #tpu.memory_space<vmem>>, vector<2x128xf32>
    %cst_35 = arith.constant dense<0.000000e+00> : vector<2x128xf32>
    %104 = tpu.matmul %101, %7, %cst_35 {dimension_numbers = #tpu.dot_dimension_numbers<[1], [0], [0], [1], [0, 0, 1, 1], [], []>} : vector<2x32xf32>, vector<32x128xf32>, vector<2x128xf32> -> vector<2x128xf32>
    %105 = arith.addf %103, %104 : vector<2x128xf32>
    %106 = vector.extract_strided_slice %105 {offsets = [0, 0], sizes = [2, 96], strides = [1, 1]} : vector<2x128xf32> to vector<2x96xf32>
    %107 = arith.negf %106 : vector<2x96xf32>
    %108 = math.exp %107 : vector<2x96xf32>
    %cst_36 = arith.constant 1.000000e+00 : f32
    %109 = vector.broadcast %cst_36 : f32 to vector<2x96xf32>
    %110 = arith.addf %109, %108 : vector<2x96xf32>
    %111 = arith.divf %109, %110 : vector<2x96xf32>
    %112 = vector.extract_strided_slice %111 {offsets = [0, 0], sizes = [2, 32], strides = [1, 1]} : vector<2x96xf32> to vector<2x32xf32>
    %113 = vector.extract_strided_slice %111 {offsets = [0, 32], sizes = [2, 32], strides = [1, 1]} : vector<2x96xf32> to vector<2x32xf32>
    %114 = vector.extract_strided_slice %111 {offsets = [0, 64], sizes = [2, 32], strides = [1, 1]} : vector<2x96xf32> to vector<2x32xf32>
    %115 = vector.extract_strided_slice %105 {offsets = [0, 96], sizes = [2, 32], strides = [1, 1]} : vector<2x128xf32> to vector<2x32xf32>
    %116 = math.tanh %115 : vector<2x32xf32>
    %117 = arith.mulf %113, %99 : vector<2x32xf32>
    %118 = arith.mulf %112, %116 : vector<2x32xf32>
    %119 = arith.addf %117, %118 : vector<2x32xf32>
    %120 = math.tanh %119 : vector<2x32xf32>
    %121 = arith.mulf %114, %120 : vector<2x32xf32>
    %c10_37 = arith.constant 10 : index
    %c0_38 = arith.constant 0 : index
    %122 = vector.load %arg9[%c10_37, %c0_38] : memref<16x32xf32, #tpu.memory_space<vmem>>, vector<2x32xf32>
    tpu.vector_store %arg9[%c10_37, %c0_38], %121 {strides = array<i32>} : memref<16x32xf32, #tpu.memory_space<vmem>>, vector<2x32xf32>,
    %c12 = arith.constant 12 : index
    %c0_39 = arith.constant 0 : index
    %123 = vector.load %arg8[%c12, %c0_39] : memref<16x128xf32, #tpu.memory_space<vmem>>, vector<2x128xf32>
    %cst_40 = arith.constant dense<0.000000e+00> : vector<2x128xf32>
    %124 = tpu.matmul %121, %7, %cst_40 {dimension_numbers = #tpu.dot_dimension_numbers<[1], [0], [0], [1], [0, 0, 1, 1], [], []>} : vector<2x32xf32>, vector<32x128xf32>, vector<2x128xf32> -> vector<2x128xf32>
    %125 = arith.addf %123, %124 : vector<2x128xf32>
    %126 = vector.extract_strided_slice %125 {offsets = [0, 0], sizes = [2, 96], strides = [1, 1]} : vector<2x128xf32> to vector<2x96xf32>
    %127 = arith.negf %126 : vector<2x96xf32>
    %128 = math.exp %127 : vector<2x96xf32>
    %cst_41 = arith.constant 1.000000e+00 : f32
    %129 = vector.broadcast %cst_41 : f32 to vector<2x96xf32>
    %130 = arith.addf %129, %128 : vector<2x96xf32>
    %131 = arith.divf %129, %130 : vector<2x96xf32>
    %132 = vector.extract_strided_slice %131 {offsets = [0, 0], sizes = [2, 32], strides = [1, 1]} : vector<2x96xf32> to vector<2x32xf32>
    %133 = vector.extract_strided_slice %131 {offsets = [0, 32], sizes = [2, 32], strides = [1, 1]} : vector<2x96xf32> to vector<2x32xf32>
    %134 = vector.extract_strided_slice %131 {offsets = [0, 64], sizes = [2, 32], strides = [1, 1]} : vector<2x96xf32> to vector<2x32xf32>
    %135 = vector.extract_strided_slice %125 {offsets = [0, 96], sizes = [2, 32], strides = [1, 1]} : vector<2x128xf32> to vector<2x32xf32>
    %136 = math.tanh %135 : vector<2x32xf32>
    %137 = arith.mulf %133, %119 : vector<2x32xf32>
    %138 = arith.mulf %132, %136 : vector<2x32xf32>
    %139 = arith.addf %137, %138 : vector<2x32xf32>
    %140 = math.tanh %139 : vector<2x32xf32>
    %141 = arith.mulf %134, %140 : vector<2x32xf32>
    %c12_42 = arith.constant 12 : index
    %c0_43 = arith.constant 0 : index
    %142 = vector.load %arg9[%c12_42, %c0_43] : memref<16x32xf32, #tpu.memory_space<vmem>>, vector<2x32xf32>
    tpu.vector_store %arg9[%c12_42, %c0_43], %141 {strides = array<i32>} : memref<16x32xf32, #tpu.memory_space<vmem>>, vector<2x32xf32>,
    %c14 = arith.constant 14 : index
    %c0_44 = arith.constant 0 : index
    %143 = vector.load %arg8[%c14, %c0_44] : memref<16x128xf32, #tpu.memory_space<vmem>>, vector<2x128xf32>
    %cst_45 = arith.constant dense<0.000000e+00> : vector<2x128xf32>
    %144 = tpu.matmul %141, %7, %cst_45 {dimension_numbers = #tpu.dot_dimension_numbers<[1], [0], [0], [1], [0, 0, 1, 1], [], []>} : vector<2x32xf32>, vector<32x128xf32>, vector<2x128xf32> -> vector<2x128xf32>
    %145 = arith.addf %143, %144 : vector<2x128xf32>
    %146 = vector.extract_strided_slice %145 {offsets = [0, 0], sizes = [2, 96], strides = [1, 1]} : vector<2x128xf32> to vector<2x96xf32>
    %147 = arith.negf %146 : vector<2x96xf32>
    %148 = math.exp %147 : vector<2x96xf32>
    %cst_46 = arith.constant 1.000000e+00 : f32
    %149 = vector.broadcast %cst_46 : f32 to vector<2x96xf32>
    %150 = arith.addf %149, %148 : vector<2x96xf32>
    %151 = arith.divf %149, %150 : vector<2x96xf32>
    %152 = vector.extract_strided_slice %151 {offsets = [0, 0], sizes = [2, 32], strides = [1, 1]} : vector<2x96xf32> to vector<2x32xf32>
    %153 = vector.extract_strided_slice %151 {offsets = [0, 32], sizes = [2, 32], strides = [1, 1]} : vector<2x96xf32> to vector<2x32xf32>
    %154 = vector.extract_strided_slice %151 {offsets = [0, 64], sizes = [2, 32], strides = [1, 1]} : vector<2x96xf32> to vector<2x32xf32>
    %155 = vector.extract_strided_slice %145 {offsets = [0, 96], sizes = [2, 32], strides = [1, 1]} : vector<2x128xf32> to vector<2x32xf32>
    %156 = math.tanh %155 : vector<2x32xf32>
    %157 = arith.mulf %153, %139 : vector<2x32xf32>
    %158 = arith.mulf %152, %156 : vector<2x32xf32>
    %159 = arith.addf %157, %158 : vector<2x32xf32>
    %160 = math.tanh %159 : vector<2x32xf32>
    %161 = arith.mulf %154, %160 : vector<2x32xf32>
    %c14_47 = arith.constant 14 : index
    %c0_48 = arith.constant 0 : index
    %162 = vector.load %arg9[%c14_47, %c0_48] : memref<16x32xf32, #tpu.memory_space<vmem>>, vector<2x32xf32>
    tpu.vector_store %arg9[%c14_47, %c0_48], %161 {strides = array<i32>} : memref<16x32xf32, #tpu.memory_space<vmem>>, vector<2x32xf32>,
    %c0_49 = arith.constant 0 : index
    %c0_50 = arith.constant 0 : index
    %163 = vector.load %arg9[%c0_49, %c0_50] : memref<16x32xf32, #tpu.memory_space<vmem>>, vector<16x32xf32>
    %c0_51 = arith.constant 0 : index
    %c0_52 = arith.constant 0 : index
    %164 = vector.load %arg4[%c0_51, %c0_52] : memref<32x128xf32, #tpu.memory_space<vmem>>, vector<32x128xf32>
    %cst_53 = arith.constant dense<0.000000e+00> : vector<16x128xf32>
    %165 = tpu.matmul %163, %164, %cst_53 {dimension_numbers = #tpu.dot_dimension_numbers<[1], [0], [0], [1], [0, 0, 1, 1], [], []>} : vector<16x32xf32>, vector<32x128xf32>, vector<16x128xf32> -> vector<16x128xf32>
    %c0_54 = arith.constant 0 : index
    %c0_55 = arith.constant 0 : index
    %166 = vector.load %arg6[%c0_54, %c0_55] : memref<1x128xf32, #tpu.memory_space<vmem>>, vector<1x128xf32>
    %167 = vector.broadcast %166 : vector<1x128xf32> to vector<16x128xf32>
    %168 = arith.addf %165, %167 : vector<16x128xf32>
    %c0_56 = arith.constant 0 : index
    %c0_57 = arith.constant 0 : index
    %169 = vector.load %arg8[%c0_56, %c0_57] : memref<16x128xf32, #tpu.memory_space<vmem>>, vector<16x128xf32>
    tpu.vector_store %arg8[%c0_56, %c0_57], %168 {strides = array<i32>} : memref<16x128xf32, #tpu.memory_space<vmem>>, vector<16x128xf32>,
    %c0_58 = arith.constant 0 : index
    %c0_59 = arith.constant 0 : index
    %170 = vector.load %arg5[%c0_58, %c0_59] : memref<32x128xf32, #tpu.memory_space<vmem>>, vector<32x128xf32>
    %c0_60 = arith.constant 0 : index
    %c0_61 = arith.constant 0 : index
    %171 = vector.load %arg8[%c0_60, %c0_61] : memref<16x128xf32, #tpu.memory_space<vmem>>, vector<2x128xf32>
    %172 = vector.extract_strided_slice %171 {offsets = [0, 0], sizes = [2, 96], strides = [1, 1]} : vector<2x128xf32> to vector<2x96xf32>
    %173 = arith.negf %172 : vector<2x96xf32>
    %174 = math.exp %173 : vector<2x96xf32>
    %cst_62 = arith.constant 1.000000e+00 : f32
    %175 = vector.broadcast %cst_62 : f32 to vector<2x96xf32>
    %176 = arith.addf %175, %174 : vector<2x96xf32>
    %177 = arith.divf %175, %176 : vector<2x96xf32>
    %178 = vector.extract_strided_slice %177 {offsets = [0, 0], sizes = [2, 32], strides = [1, 1]} : vector<2x96xf32> to vector<2x32xf32>
    %179 = vector.extract_strided_slice %177 {offsets = [0, 64], sizes = [2, 32], strides = [1, 1]} : vector<2x96xf32> to vector<2x32xf32>
    %180 = vector.extract_strided_slice %171 {offsets = [0, 96], sizes = [2, 32], strides = [1, 1]} : vector<2x128xf32> to vector<2x32xf32>
    %181 = math.tanh %180 : vector<2x32xf32>
    %182 = arith.mulf %178, %181 : vector<2x32xf32>
    %183 = math.tanh %182 : vector<2x32xf32>
    %184 = arith.mulf %179, %183 : vector<2x32xf32>
    %c0_63 = arith.constant 0 : index
    %c0_64 = arith.constant 0 : index
    %185 = vector.load %arg7[%c0_63, %c0_64] : memref<16x32xf32, #tpu.memory_space<vmem>>, vector<2x32xf32>
    tpu.vector_store %arg7[%c0_63, %c0_64], %184 {strides = array<i32>} : memref<16x32xf32, #tpu.memory_space<vmem>>, vector<2x32xf32>,
    %c2_65 = arith.constant 2 : index
    %c0_66 = arith.constant 0 : index
    %186 = vector.load %arg8[%c2_65, %c0_66] : memref<16x128xf32, #tpu.memory_space<vmem>>, vector<2x128xf32>
    %cst_67 = arith.constant dense<0.000000e+00> : vector<2x128xf32>
    %187 = tpu.matmul %184, %170, %cst_67 {dimension_numbers = #tpu.dot_dimension_numbers<[1], [0], [0], [1], [0, 0, 1, 1], [], []>} : vector<2x32xf32>, vector<32x128xf32>, vector<2x128xf32> -> vector<2x128xf32>
    %188 = arith.addf %186, %187 : vector<2x128xf32>
    %189 = vector.extract_strided_slice %188 {offsets = [0, 0], sizes = [2, 96], strides = [1, 1]} : vector<2x128xf32> to vector<2x96xf32>
    %190 = arith.negf %189 : vector<2x96xf32>
    %191 = math.exp %190 : vector<2x96xf32>
    %cst_68 = arith.constant 1.000000e+00 : f32
    %192 = vector.broadcast %cst_68 : f32 to vector<2x96xf32>
    %193 = arith.addf %192, %191 : vector<2x96xf32>
    %194 = arith.divf %192, %193 : vector<2x96xf32>
    %195 = vector.extract_strided_slice %194 {offsets = [0, 0], sizes = [2, 32], strides = [1, 1]} : vector<2x96xf32> to vector<2x32xf32>
    %196 = vector.extract_strided_slice %194 {offsets = [0, 32], sizes = [2, 32], strides = [1, 1]} : vector<2x96xf32> to vector<2x32xf32>
    %197 = vector.extract_strided_slice %194 {offsets = [0, 64], sizes = [2, 32], strides = [1, 1]} : vector<2x96xf32> to vector<2x32xf32>
    %198 = vector.extract_strided_slice %188 {offsets = [0, 96], sizes = [2, 32], strides = [1, 1]} : vector<2x128xf32> to vector<2x32xf32>
    %199 = math.tanh %198 : vector<2x32xf32>
    %200 = arith.mulf %196, %182 : vector<2x32xf32>
    %201 = arith.mulf %195, %199 : vector<2x32xf32>
    %202 = arith.addf %200, %201 : vector<2x32xf32>
    %203 = math.tanh %202 : vector<2x32xf32>
    %204 = arith.mulf %197, %203 : vector<2x32xf32>
    %c2_69 = arith.constant 2 : index
    %c0_70 = arith.constant 0 : index
    %205 = vector.load %arg7[%c2_69, %c0_70] : memref<16x32xf32, #tpu.memory_space<vmem>>, vector<2x32xf32>
    tpu.vector_store %arg7[%c2_69, %c0_70], %204 {strides = array<i32>} : memref<16x32xf32, #tpu.memory_space<vmem>>, vector<2x32xf32>,
    %c4_71 = arith.constant 4 : index
    %c0_72 = arith.constant 0 : index
    %206 = vector.load %arg8[%c4_71, %c0_72] : memref<16x128xf32, #tpu.memory_space<vmem>>, vector<2x128xf32>
    %cst_73 = arith.constant dense<0.000000e+00> : vector<2x128xf32>
    %207 = tpu.matmul %204, %170, %cst_73 {dimension_numbers = #tpu.dot_dimension_numbers<[1], [0], [0], [1], [0, 0, 1, 1], [], []>} : vector<2x32xf32>, vector<32x128xf32>, vector<2x128xf32> -> vector<2x128xf32>
    %208 = arith.addf %206, %207 : vector<2x128xf32>
    %209 = vector.extract_strided_slice %208 {offsets = [0, 0], sizes = [2, 96], strides = [1, 1]} : vector<2x128xf32> to vector<2x96xf32>
    %210 = arith.negf %209 : vector<2x96xf32>
    %211 = math.exp %210 : vector<2x96xf32>
    %cst_74 = arith.constant 1.000000e+00 : f32
    %212 = vector.broadcast %cst_74 : f32 to vector<2x96xf32>
    %213 = arith.addf %212, %211 : vector<2x96xf32>
    %214 = arith.divf %212, %213 : vector<2x96xf32>
    %215 = vector.extract_strided_slice %214 {offsets = [0, 0], sizes = [2, 32], strides = [1, 1]} : vector<2x96xf32> to vector<2x32xf32>
    %216 = vector.extract_strided_slice %214 {offsets = [0, 32], sizes = [2, 32], strides = [1, 1]} : vector<2x96xf32> to vector<2x32xf32>
    %217 = vector.extract_strided_slice %214 {offsets = [0, 64], sizes = [2, 32], strides = [1, 1]} : vector<2x96xf32> to vector<2x32xf32>
    %218 = vector.extract_strided_slice %208 {offsets = [0, 96], sizes = [2, 32], strides = [1, 1]} : vector<2x128xf32> to vector<2x32xf32>
    %219 = math.tanh %218 : vector<2x32xf32>
    %220 = arith.mulf %216, %202 : vector<2x32xf32>
    %221 = arith.mulf %215, %219 : vector<2x32xf32>
    %222 = arith.addf %220, %221 : vector<2x32xf32>
    %223 = math.tanh %222 : vector<2x32xf32>
    %224 = arith.mulf %217, %223 : vector<2x32xf32>
    %c4_75 = arith.constant 4 : index
    %c0_76 = arith.constant 0 : index
    %225 = vector.load %arg7[%c4_75, %c0_76] : memref<16x32xf32, #tpu.memory_space<vmem>>, vector<2x32xf32>
    tpu.vector_store %arg7[%c4_75, %c0_76], %224 {strides = array<i32>} : memref<16x32xf32, #tpu.memory_space<vmem>>, vector<2x32xf32>,
    %c6_77 = arith.constant 6 : index
    %c0_78 = arith.constant 0 : index
    %226 = vector.load %arg8[%c6_77, %c0_78] : memref<16x128xf32, #tpu.memory_space<vmem>>, vector<2x128xf32>
    %cst_79 = arith.constant dense<0.000000e+00> : vector<2x128xf32>
    %227 = tpu.matmul %224, %170, %cst_79 {dimension_numbers = #tpu.dot_dimension_numbers<[1], [0], [0], [1], [0, 0, 1, 1], [], []>} : vector<2x32xf32>, vector<32x128xf32>, vector<2x128xf32> -> vector<2x128xf32>
    %228 = arith.addf %226, %227 : vector<2x128xf32>
    %229 = vector.extract_strided_slice %228 {offsets = [0, 0], sizes = [2, 96], strides = [1, 1]} : vector<2x128xf32> to vector<2x96xf32>
    %230 = arith.negf %229 : vector<2x96xf32>
    %231 = math.exp %230 : vector<2x96xf32>
    %cst_80 = arith.constant 1.000000e+00 : f32
    %232 = vector.broadcast %cst_80 : f32 to vector<2x96xf32>
    %233 = arith.addf %232, %231 : vector<2x96xf32>
    %234 = arith.divf %232, %233 : vector<2x96xf32>
    %235 = vector.extract_strided_slice %234 {offsets = [0, 0], sizes = [2, 32], strides = [1, 1]} : vector<2x96xf32> to vector<2x32xf32>
    %236 = vector.extract_strided_slice %234 {offsets = [0, 32], sizes = [2, 32], strides = [1, 1]} : vector<2x96xf32> to vector<2x32xf32>
    %237 = vector.extract_strided_slice %234 {offsets = [0, 64], sizes = [2, 32], strides = [1, 1]} : vector<2x96xf32> to vector<2x32xf32>
    %238 = vector.extract_strided_slice %228 {offsets = [0, 96], sizes = [2, 32], strides = [1, 1]} : vector<2x128xf32> to vector<2x32xf32>
    %239 = math.tanh %238 : vector<2x32xf32>
    %240 = arith.mulf %236, %222 : vector<2x32xf32>
    %241 = arith.mulf %235, %239 : vector<2x32xf32>
    %242 = arith.addf %240, %241 : vector<2x32xf32>
    %243 = math.tanh %242 : vector<2x32xf32>
    %244 = arith.mulf %237, %243 : vector<2x32xf32>
    %c6_81 = arith.constant 6 : index
    %c0_82 = arith.constant 0 : index
    %245 = vector.load %arg7[%c6_81, %c0_82] : memref<16x32xf32, #tpu.memory_space<vmem>>, vector<2x32xf32>
    tpu.vector_store %arg7[%c6_81, %c0_82], %244 {strides = array<i32>} : memref<16x32xf32, #tpu.memory_space<vmem>>, vector<2x32xf32>,
    %c8_83 = arith.constant 8 : index
    %c0_84 = arith.constant 0 : index
    %246 = vector.load %arg8[%c8_83, %c0_84] : memref<16x128xf32, #tpu.memory_space<vmem>>, vector<2x128xf32>
    %cst_85 = arith.constant dense<0.000000e+00> : vector<2x128xf32>
    %247 = tpu.matmul %244, %170, %cst_85 {dimension_numbers = #tpu.dot_dimension_numbers<[1], [0], [0], [1], [0, 0, 1, 1], [], []>} : vector<2x32xf32>, vector<32x128xf32>, vector<2x128xf32> -> vector<2x128xf32>
    %248 = arith.addf %246, %247 : vector<2x128xf32>
    %249 = vector.extract_strided_slice %248 {offsets = [0, 0], sizes = [2, 96], strides = [1, 1]} : vector<2x128xf32> to vector<2x96xf32>
    %250 = arith.negf %249 : vector<2x96xf32>
    %251 = math.exp %250 : vector<2x96xf32>
    %cst_86 = arith.constant 1.000000e+00 : f32
    %252 = vector.broadcast %cst_86 : f32 to vector<2x96xf32>
    %253 = arith.addf %252, %251 : vector<2x96xf32>
    %254 = arith.divf %252, %253 : vector<2x96xf32>
    %255 = vector.extract_strided_slice %254 {offsets = [0, 0], sizes = [2, 32], strides = [1, 1]} : vector<2x96xf32> to vector<2x32xf32>
    %256 = vector.extract_strided_slice %254 {offsets = [0, 32], sizes = [2, 32], strides = [1, 1]} : vector<2x96xf32> to vector<2x32xf32>
    %257 = vector.extract_strided_slice %254 {offsets = [0, 64], sizes = [2, 32], strides = [1, 1]} : vector<2x96xf32> to vector<2x32xf32>
    %258 = vector.extract_strided_slice %248 {offsets = [0, 96], sizes = [2, 32], strides = [1, 1]} : vector<2x128xf32> to vector<2x32xf32>
    %259 = math.tanh %258 : vector<2x32xf32>
    %260 = arith.mulf %256, %242 : vector<2x32xf32>
    %261 = arith.mulf %255, %259 : vector<2x32xf32>
    %262 = arith.addf %260, %261 : vector<2x32xf32>
    %263 = math.tanh %262 : vector<2x32xf32>
    %264 = arith.mulf %257, %263 : vector<2x32xf32>
    %c8_87 = arith.constant 8 : index
    %c0_88 = arith.constant 0 : index
    %265 = vector.load %arg7[%c8_87, %c0_88] : memref<16x32xf32, #tpu.memory_space<vmem>>, vector<2x32xf32>
    tpu.vector_store %arg7[%c8_87, %c0_88], %264 {strides = array<i32>} : memref<16x32xf32, #tpu.memory_space<vmem>>, vector<2x32xf32>,
    %c10_89 = arith.constant 10 : index
    %c0_90 = arith.constant 0 : index
    %266 = vector.load %arg8[%c10_89, %c0_90] : memref<16x128xf32, #tpu.memory_space<vmem>>, vector<2x128xf32>
    %cst_91 = arith.constant dense<0.000000e+00> : vector<2x128xf32>
    %267 = tpu.matmul %264, %170, %cst_91 {dimension_numbers = #tpu.dot_dimension_numbers<[1], [0], [0], [1], [0, 0, 1, 1], [], []>} : vector<2x32xf32>, vector<32x128xf32>, vector<2x128xf32> -> vector<2x128xf32>
    %268 = arith.addf %266, %267 : vector<2x128xf32>
    %269 = vector.extract_strided_slice %268 {offsets = [0, 0], sizes = [2, 96], strides = [1, 1]} : vector<2x128xf32> to vector<2x96xf32>
    %270 = arith.negf %269 : vector<2x96xf32>
    %271 = math.exp %270 : vector<2x96xf32>
    %cst_92 = arith.constant 1.000000e+00 : f32
    %272 = vector.broadcast %cst_92 : f32 to vector<2x96xf32>
    %273 = arith.addf %272, %271 : vector<2x96xf32>
    %274 = arith.divf %272, %273 : vector<2x96xf32>
    %275 = vector.extract_strided_slice %274 {offsets = [0, 0], sizes = [2, 32], strides = [1, 1]} : vector<2x96xf32> to vector<2x32xf32>
    %276 = vector.extract_strided_slice %274 {offsets = [0, 32], sizes = [2, 32], strides = [1, 1]} : vector<2x96xf32> to vector<2x32xf32>
    %277 = vector.extract_strided_slice %274 {offsets = [0, 64], sizes = [2, 32], strides = [1, 1]} : vector<2x96xf32> to vector<2x32xf32>
    %278 = vector.extract_strided_slice %268 {offsets = [0, 96], sizes = [2, 32], strides = [1, 1]} : vector<2x128xf32> to vector<2x32xf32>
    %279 = math.tanh %278 : vector<2x32xf32>
    %280 = arith.mulf %276, %262 : vector<2x32xf32>
    %281 = arith.mulf %275, %279 : vector<2x32xf32>
    %282 = arith.addf %280, %281 : vector<2x32xf32>
    %283 = math.tanh %282 : vector<2x32xf32>
    %284 = arith.mulf %277, %283 : vector<2x32xf32>
    %c10_93 = arith.constant 10 : index
    %c0_94 = arith.constant 0 : index
    %285 = vector.load %arg7[%c10_93, %c0_94] : memref<16x32xf32, #tpu.memory_space<vmem>>, vector<2x32xf32>
    tpu.vector_store %arg7[%c10_93, %c0_94], %284 {strides = array<i32>} : memref<16x32xf32, #tpu.memory_space<vmem>>, vector<2x32xf32>,
    %c12_95 = arith.constant 12 : index
    %c0_96 = arith.constant 0 : index
    %286 = vector.load %arg8[%c12_95, %c0_96] : memref<16x128xf32, #tpu.memory_space<vmem>>, vector<2x128xf32>
    %cst_97 = arith.constant dense<0.000000e+00> : vector<2x128xf32>
    %287 = tpu.matmul %284, %170, %cst_97 {dimension_numbers = #tpu.dot_dimension_numbers<[1], [0], [0], [1], [0, 0, 1, 1], [], []>} : vector<2x32xf32>, vector<32x128xf32>, vector<2x128xf32> -> vector<2x128xf32>
    %288 = arith.addf %286, %287 : vector<2x128xf32>
    %289 = vector.extract_strided_slice %288 {offsets = [0, 0], sizes = [2, 96], strides = [1, 1]} : vector<2x128xf32> to vector<2x96xf32>
    %290 = arith.negf %289 : vector<2x96xf32>
    %291 = math.exp %290 : vector<2x96xf32>
    %cst_98 = arith.constant 1.000000e+00 : f32
    %292 = vector.broadcast %cst_98 : f32 to vector<2x96xf32>
    %293 = arith.addf %292, %291 : vector<2x96xf32>
    %294 = arith.divf %292, %293 : vector<2x96xf32>
    %295 = vector.extract_strided_slice %294 {offsets = [0, 0], sizes = [2, 32], strides = [1, 1]} : vector<2x96xf32> to vector<2x32xf32>
    %296 = vector.extract_strided_slice %294 {offsets = [0, 32], sizes = [2, 32], strides = [1, 1]} : vector<2x96xf32> to vector<2x32xf32>
    %297 = vector.extract_strided_slice %294 {offsets = [0, 64], sizes = [2, 32], strides = [1, 1]} : vector<2x96xf32> to vector<2x32xf32>
    %298 = vector.extract_strided_slice %288 {offsets = [0, 96], sizes = [2, 32], strides = [1, 1]} : vector<2x128xf32> to vector<2x32xf32>
    %299 = math.tanh %298 : vector<2x32xf32>
    %300 = arith.mulf %296, %282 : vector<2x32xf32>
    %301 = arith.mulf %295, %299 : vector<2x32xf32>
    %302 = arith.addf %300, %301 : vector<2x32xf32>
    %303 = math.tanh %302 : vector<2x32xf32>
    %304 = arith.mulf %297, %303 : vector<2x32xf32>
    %c12_99 = arith.constant 12 : index
    %c0_100 = arith.constant 0 : index
    %305 = vector.load %arg7[%c12_99, %c0_100] : memref<16x32xf32, #tpu.memory_space<vmem>>, vector<2x32xf32>
    tpu.vector_store %arg7[%c12_99, %c0_100], %304 {strides = array<i32>} : memref<16x32xf32, #tpu.memory_space<vmem>>, vector<2x32xf32>,
    %c14_101 = arith.constant 14 : index
    %c0_102 = arith.constant 0 : index
    %306 = vector.load %arg8[%c14_101, %c0_102] : memref<16x128xf32, #tpu.memory_space<vmem>>, vector<2x128xf32>
    %cst_103 = arith.constant dense<0.000000e+00> : vector<2x128xf32>
    %307 = tpu.matmul %304, %170, %cst_103 {dimension_numbers = #tpu.dot_dimension_numbers<[1], [0], [0], [1], [0, 0, 1, 1], [], []>} : vector<2x32xf32>, vector<32x128xf32>, vector<2x128xf32> -> vector<2x128xf32>
    %308 = arith.addf %306, %307 : vector<2x128xf32>
    %309 = vector.extract_strided_slice %308 {offsets = [0, 0], sizes = [2, 96], strides = [1, 1]} : vector<2x128xf32> to vector<2x96xf32>
    %310 = arith.negf %309 : vector<2x96xf32>
    %311 = math.exp %310 : vector<2x96xf32>
    %cst_104 = arith.constant 1.000000e+00 : f32
    %312 = vector.broadcast %cst_104 : f32 to vector<2x96xf32>
    %313 = arith.addf %312, %311 : vector<2x96xf32>
    %314 = arith.divf %312, %313 : vector<2x96xf32>
    %315 = vector.extract_strided_slice %314 {offsets = [0, 0], sizes = [2, 32], strides = [1, 1]} : vector<2x96xf32> to vector<2x32xf32>
    %316 = vector.extract_strided_slice %314 {offsets = [0, 32], sizes = [2, 32], strides = [1, 1]} : vector<2x96xf32> to vector<2x32xf32>
    %317 = vector.extract_strided_slice %314 {offsets = [0, 64], sizes = [2, 32], strides = [1, 1]} : vector<2x96xf32> to vector<2x32xf32>
    %318 = vector.extract_strided_slice %308 {offsets = [0, 96], sizes = [2, 32], strides = [1, 1]} : vector<2x128xf32> to vector<2x32xf32>
    %319 = math.tanh %318 : vector<2x32xf32>
    %320 = arith.mulf %316, %302 : vector<2x32xf32>
    %321 = arith.mulf %315, %319 : vector<2x32xf32>
    %322 = arith.addf %320, %321 : vector<2x32xf32>
    %323 = math.tanh %322 : vector<2x32xf32>
    %324 = arith.mulf %317, %323 : vector<2x32xf32>
    %c14_105 = arith.constant 14 : index
    %c0_106 = arith.constant 0 : index
    %325 = vector.load %arg7[%c14_105, %c0_106] : memref<16x32xf32, #tpu.memory_space<vmem>>, vector<2x32xf32>
    tpu.vector_store %arg7[%c14_105, %c0_106], %324 {strides = array<i32>} : memref<16x32xf32, #tpu.memory_space<vmem>>, vector<2x32xf32>,
    return
  }
}

</mosaic_0001>

<llo_original>
// kernel: clinical_processor_forward.1
$region0: #{clinical_processor_forward.1}
  #allocation0 [shape = 'u32[]', space=smem, size = 0x4, offset = 0x4, fixed_abs, tag = 'smem constant byte address 0x4 - core index']
  #allocation1 [shape = 'u32[144,128]{1,0:T(1,128)}', space=vmem, size = 0x12000, scoped, tag = 'internal scratch']
  #allocation2 [shape = 'f32[16,128]{1,0:T(8,128)}', space=vmem, size = 0x2000, scoped, tag = 'scratch operand']
  #allocation3 [shape = 'f32[16,32]{1,0:T(8,128)}', space=vmem, size = 0x2000, scoped, tag = 'scratch operand']
  %s0 = inlined_call_operand.vmem [shape: f32[16,4], index: 0, kind: input, shape index: {}]
  %s1 = inlined_call_operand.vmem [shape: f32[4,128], index: 1, kind: input, shape index: {}]
  %s2 = inlined_call_operand.hbm [shape: f32[32,128], index: 2, kind: input, shape index: {}]
  %s3 = inlined_call_operand.hbm [shape: f32[1,128], index: 3, kind: input, shape index: {}]
  %s4 = inlined_call_operand.vmem [shape: f32[32,128], index: 4, kind: input, shape index: {}]
  %s5 = inlined_call_operand.hbm [shape: f32[32,128], index: 5, kind: input, shape index: {}]
  %s6 = inlined_call_operand.hbm [shape: f32[1,128], index: 6, kind: input, shape index: {}]
  %s7 = inlined_call_operand.vmem [shape: f32[16,32], index: 7, kind: output, shape index: {}]
  %s8 = sld [smem:[#allocation0]]
  $region54: #{clinical_processor_forward.1} parent=0
    _
  %s10 = ssub.s32 1, %s8
  %s11 = scalar_select 0, %s10, %s8
  $region1: #{clinical_processor_forward.1} parent=0
    #allocation4 [shape = 'u8[16384]{0}', space=vmem, size = 0x4000, scoped, tag = 'input window, operand 2, single buffered']
    #allocation5 [shape = 's32[1]{0}', space=sflag, size = 0x4, scoped, tag = 'scoped memory for clinical_processor_forward.1']
    #allocation6 [shape = 'u8[512]{0}', space=vmem, size = 0x400, scoped, tag = 'input window, operand 3, single buffered']
    #allocation7 [shape = 's32[1]{0}', space=sflag, size = 0x4, scoped, tag = 'scoped memory for clinical_processor_forward.1']
    #allocation8 [shape = 'u8[16384]{0}', space=vmem, size = 0x4000, scoped, tag = 'input window, operand 5, single buffered']
    #allocation9 [shape = 'u8[512]{0}', space=vmem, size = 0x400, scoped, tag = 'input window, operand 6, single buffered']
    #allocation10 [shape = 's32[1]{0}', space=sflag, size = 0x4, scoped, tag = 'scoped memory for clinical_processor_forward.1']
    %12 = vsyncpa [#allocation5], 0
    %13 = vsyncpa [#allocation7], 0
    %14 = vsyncpa [#allocation10], 0
    // Predicated region
    $region2: #{clinical_processor_forward.1} parent=1 // pred_check
      _
    $region3: #{clinical_processor_forward.1} parent=1 // pred_check_branch
      %16 = sbr.rel (0) target = $region5
    $region4: #{clinical_processor_forward.1} parent=1 // pred_region
      _
    $region5: #{clinical_processor_forward.1} parent=1 // pred_fallthru
      _
    // Predicated region
    $region6: #{clinical_processor_forward.1} parent=1 // pred_check
      _
    $region7: #{clinical_processor_forward.1} parent=1 // pred_check_branch
      %18 = sbr.rel (0) target = $region9
    $region8: #{clinical_processor_forward.1} parent=1 // pred_region
      _
    $region9: #{clinical_processor_forward.1} parent=1 // pred_fallthru
      _
    // Predicated region
    $region10: #{clinical_processor_forward.1} parent=1 // pred_check
      _
    $region11: #{clinical_processor_forward.1} parent=1 // pred_check_branch
      %20 = sbr.rel (0) target = $region13
    $region12: #{clinical_processor_forward.1} parent=1 // pred_region
      %s22 = ssub.s32 512, 512
      %23 = vsyncadd [#allocation5], %s22
      %s24 = sshll.u32 [#allocation4], 4
      %s25 = int_to_ptr.vmem [resolvable:$true] %s24
      %30 = dma.hbm_to_vmem [thread:$0]  %s2, 512, %s25, [#allocation5], 128, 128, 8
    $region13: #{clinical_processor_forward.1} parent=1 // pred_fallthru
      _
    // Predicated region
    $region14: #{clinical_processor_forward.1} parent=1 // pred_check
      _
    $region15: #{clinical_processor_forward.1} parent=1 // pred_check_branch
      %32 = sbr.rel (0) target = $region17
    $region16: #{clinical_processor_forward.1} parent=1 // pred_region
      %s34 = ssub.s32 16, 16
      %35 = vsyncadd [#allocation7], %s34
      %s37 = sshll.u32 [#allocation6], 4
      %s38 = int_to_ptr.vmem [resolvable:$true] %s37
      %40 = dma.hbm_to_vmem [thread:$0]  %s3, 16, %s38, [#allocation7]
    $region17: #{clinical_processor_forward.1} parent=1 // pred_fallthru
      _
    // Predicated region
    $region18: #{clinical_processor_forward.1} parent=1 // pred_check
      _
    $region19: #{clinical_processor_forward.1} parent=1 // pred_check_branch
      %42 = sbr.rel (0) target = $region21
    $region20: #{clinical_processor_forward.1} parent=1 // pred_region
      _
    $region21: #{clinical_processor_forward.1} parent=1 // pred_fallthru
      _
    // Predicated region
    $region22: #{clinical_processor_forward.1} parent=1 // pred_check
      _
    $region23: #{clinical_processor_forward.1} parent=1 // pred_check_branch
      %44 = sbr.rel (0) target = $region25
    $region24: #{clinical_processor_forward.1} parent=1 // pred_region
      %s46 = ssub.s32 512, 512
      %47 = vsyncadd [#allocation7], %s46
      %s48 = sshll.u32 [#allocation8], 4
      %s49 = int_to_ptr.vmem [resolvable:$true] %s48
      %54 = dma.hbm_to_vmem [thread:$0]  %s5, 512, %s49, [#allocation7], 128, 128, 8
    $region25: #{clinical_processor_forward.1} parent=1 // pred_fallthru
      _
    // Predicated region
    $region26: #{clinical_processor_forward.1} parent=1 // pred_check
      _
    $region27: #{clinical_processor_forward.1} parent=1 // pred_check_branch
      %56 = sbr.rel (0) target = $region29
    $region28: #{clinical_processor_forward.1} parent=1 // pred_region
      %s58 = ssub.s32 16, 16
      %59 = vsyncadd [#allocation10], %s58
      %s61 = sshll.u32 [#allocation9], 4
      %s62 = int_to_ptr.vmem [resolvable:$true] %s61
      %64 = dma.hbm_to_vmem [thread:$0]  %s6, 16, %s62, [#allocation10]
    $region29: #{clinical_processor_forward.1} parent=1 // pred_fallthru
      _
    // Predicated region
    $region30: #{clinical_processor_forward.1} parent=1 // pred_check
      _
    $region31: #{clinical_processor_forward.1} parent=1 // pred_check_branch
      %66 = sbr.rel (0) target = $region33
    $region32: #{clinical_processor_forward.1} parent=1 // pred_region
      %67 = dma.done [#allocation5], 512
    $region33: #{clinical_processor_forward.1} parent=1 // pred_fallthru
      _
    // Predicated region
    $region34: #{clinical_processor_forward.1} parent=1 // pred_check
      _
    $region35: #{clinical_processor_forward.1} parent=1 // pred_check_branch
      %69 = sbr.rel (0) target = $region37
    $region36: #{clinical_processor_forward.1} parent=1 // pred_region
      %70 = dma.done [#allocation7], 16
    $region37: #{clinical_processor_forward.1} parent=1 // pred_fallthru
      _
    // Predicated region
    $region38: #{clinical_processor_forward.1} parent=1 // pred_check
      _
    $region39: #{clinical_processor_forward.1} parent=1 // pred_check_branch
      %72 = sbr.rel (0) target = $region41
    $region40: #{clinical_processor_forward.1} parent=1 // pred_region
      %73 = dma.done [#allocation7], 512
    $region41: #{clinical_processor_forward.1} parent=1 // pred_fallthru
      _
    // Predicated region
    $region42: #{clinical_processor_forward.1} parent=1 // pred_check
      _
    $region43: #{clinical_processor_forward.1} parent=1 // pred_check_branch
      %75 = sbr.rel (0) target = $region45
    $region44: #{clinical_processor_forward.1} parent=1 // pred_region
      %76 = dma.done [#allocation10], 16
    $region45: #{clinical_processor_forward.1} parent=1 // pred_fallthru
      _
    %v77 = vld [vmem:[%s0] sm:$0xff]
    %v78 = vld [vmem:[%s0 + $0x8] sm:$0xff]
    %v79 = vld [vmem:[%s1] sm:$0xf]
    %v80 = vld [vmem:[#allocation6] sm:$0x1]
    %v82 = vlaneseq
    %v83 = vshrl.u32 %v82, 7
    %v84 = vsub.s32 0, %v83
    %v85 = vrot.slane %v80, %v84
    %vm87 = vcmask 31744
    %v89 = vsel %vm87, %v77, 0
    %v92 = vsel %vm87, %v78, 0
    %vm94 = vcmask 1043456
    %v96 = vsel %vm94, %v79, 0
    %98 = vmatprep.subr.mxu0 0.0
    %99 = vmatpush1.msra.mxu0 0.0
    %100 = vmatprep.subr.mxu0 0.0
    %101 = vmatpush1.msra.mxu0 0.0
    %102 = vmatprep.subr.mxu0 0.0
    %103 = vmatpush1.msra.mxu0 0.0
    %104 = vmatprep.subr.mxu0 0.0
    %105 = vmatpush1.msra.mxu0 0.0
    %106 = vmatprep.subr.mxu0 0.0
    %107 = vmatpush1.msra.mxu0 0.0
    %108 = vmatprep.subr.mxu0 0.0
    %109 = vmatpush1.msra.mxu0 0.0
    %110 = vmatprep.subr.mxu0 0.0
    %111 = vmatpush1.msra.mxu0 0.0
    %112 = vmatprep.subr.mxu0 0.0
    %113 = vmatpush1.msra.mxu0 0.0
    %114 = vmatprep.subr.mxu0 0.0
    %115 = vmatpush1.msra.mxu0 0.0
    %116 = vmatprep.subr.mxu0 0.0
    %117 = vmatpush1.msra.mxu0 0.0
    %118 = vmatprep.subr.mxu0 0.0
    %119 = vmatpush1.msra.mxu0 0.0
    %120 = vmatprep.subr.mxu0 0.0
    %121 = vmatpush1.msra.mxu0 0.0
    %122 = vmatprep.subr.mxu0 0.0
    %123 = vmatpush1.msra.mxu0 0.0
    %124 = vmatprep.subr.mxu0 0.0
    %125 = vmatpush1.msra.mxu0 0.0
    %126 = vmatprep.subr.mxu0 0.0
    %127 = vmatpush1.msra.mxu0 0.0
    %128 = vmatprep.subr.mxu0 0.0
    %129 = vmatpush1.msra.mxu0 %v96
    %130 = vmatprep.subr.mxu0 0.0
    %131 = vmatpush2.msra.mxu0 0.0
    %132 = vmatprep.subr.mxu0 0.0
    %133 = vmatpush2.msra.mxu0 0.0
    %134 = vmatprep.subr.mxu0 0.0
    %135 = vmatpush2.msra.mxu0 0.0
    %136 = vmatprep.subr.mxu0 0.0
    %137 = vmatpush2.msra.mxu0 0.0
    %138 = vmatprep.subr.mxu0 0.0
    %139 = vmatpush2.msra.mxu0 0.0
    %140 = vmatprep.subr.mxu0 0.0
    %141 = vmatpush2.msra.mxu0 0.0
    %142 = vmatprep.subr.mxu0 0.0
    %143 = vmatpush2.msra.mxu0 0.0
    %144 = vmatprep.subr.mxu0 0.0
    %145 = vmatpush2.msra.mxu0 0.0
    %146 = vmatprep.subr.mxu0 0.0
    %147 = vmatpush2.msra.mxu0 0.0
    %148 = vmatprep.subr.mxu0 0.0
    %149 = vmatpush2.msra.mxu0 0.0
    %150 = vmatprep.subr.mxu0 0.0
    %151 = vmatpush2.msra.mxu0 0.0
    %152 = vmatprep.subr.mxu0 0.0
    %153 = vmatpush2.msra.mxu0 0.0
    %154 = vmatprep.subr.mxu0 0.0
    %155 = vmatpush2.msra.mxu0 0.0
    %156 = vmatprep.subr.mxu0 0.0
    %157 = vmatpush2.msra.mxu0 0.0
    %158 = vmatprep.subr.mxu0 0.0
    %159 = vmatpush2.msra.mxu0 0.0
    %160 = vmatprep.subr.mxu0 0.0
    %161 = vmatpush2.msra.mxu0 0.0
    %162 = vmatprep.mubr.f32.mxu0 0.0
    %163 = vmatmul.mubr.f32.gmra.mxu0 %v89
    %v164 = vpop.f32.mrf.mxu0
    %v165 = vadd.f32 %v85, %v164
    %v166 = vpop.f32.mrf.mxu0
    %167 = vmatprep.mubr.f32.mxu0 0.0
    %168 = vmatmul.mubr.f32.gmra.mxu0 %v92
    %v169 = vpop.f32.mrf.mxu0
    %v170 = vadd.f32 %v85, %v169
    %v171 = vpop.f32.mrf.mxu0
    %172 = vdwg.mxu0
    %173 = vst [vmem:[#allocation2] sm:$0xff] %v165
    %174 = vst [vmem:[#allocation2 + $0x8] sm:$0xff] %v170
    %v175 = vld [vmem:[#allocation4] sm:$0xff]
    %v176 = vld [vmem:[#allocation4 + $0x8] sm:$0xff]
    %v177 = vld [vmem:[#allocation4 + $0x10] sm:$0xff]
    %v178 = vld [vmem:[#allocation4 + $0x18] sm:$0xff]
    %v179 = vld [vmem:[#allocation2] sm:$0x3]
    %v180 = vxor.u32 %v179, 2147483648
    %v181 = vmul.f32 %v180, 1.442695
    %v182 = vpow.pop %v181
    %v183 = vadd.f32 %v182, 1.0
    %v184 = vrcp.pop %v183
    %v185 = vmul.f32 1.0, %v184
    %v186 = vtanh.pop %v179
    %188 = vrot.lane.b32.xlu0 %v186, 32
    %v189 = vpop.permute.xlu0 %188
    %v191 = vmul.f32 %v185, %v189
    %v192 = vtanh.pop %v191
    %194 = vrot.lane.b32.xlu0 %v192, 64
    %v195 = vpop.permute.xlu0 %194
    %v197 = vmul.f32 %v185, %v195
    %199 = vrot.lane.b32.xlu0 %v197, 64
    %v200 = vpop.permute.xlu0 %199
    %vm202 = vcmask 254976
    %203 = vst.msk [vmem:[#allocation3] sm:$0x3] %vm202, %v200
    %v204 = vld [vmem:[#allocation2 + $0x2] sm:$0x3]
    %vm205 = vcmask 261120
    %v206 = vsel %vm205, %v200, 0
    %208 = vmatprep.subr.mxu0 0.0
    %209 = vmatpush1.msra.mxu0 0.0
    %210 = vmatprep.subr.mxu0 0.0
    %211 = vmatpush1.msra.mxu0 0.0
    %212 = vmatprep.subr.mxu0 0.0
    %213 = vmatpush1.msra.mxu0 0.0
    %214 = vmatprep.subr.mxu0 0.0
    %215 = vmatpush1.msra.mxu0 0.0
    %216 = vmatprep.subr.mxu0 0.0
    %217 = vmatpush1.msra.mxu0 0.0
    %218 = vmatprep.subr.mxu0 0.0
    %219 = vmatpush1.msra.mxu0 0.0
    %220 = vmatprep.subr.mxu0 0.0
    %221 = vmatpush1.msra.mxu0 0.0
    %222 = vmatprep.subr.mxu0 0.0
    %223 = vmatpush1.msra.mxu0 0.0
    %224 = vmatprep.subr.mxu0 0.0
    %225 = vmatpush1.msra.mxu0 0.0
    %226 = vmatprep.subr.mxu0 0.0
    %227 = vmatpush1.msra.mxu0 0.0
    %228 = vmatprep.subr.mxu0 0.0
    %229 = vmatpush1.msra.mxu0 0.0
    %230 = vmatprep.subr.mxu0 0.0
    %231 = vmatpush1.msra.mxu0 0.0
    %232 = vmatprep.subr.mxu0 0.0
    %233 = vmatpush1.msra.mxu0 %v178
    %234 = vmatprep.subr.mxu0 0.0
    %235 = vmatpush1.msra.mxu0 %v177
    %236 = vmatprep.subr.mxu0 0.0
    %237 = vmatpush1.msra.mxu0 %v176
    %238 = vmatprep.subr.mxu0 0.0
    %239 = vmatpush1.msra.mxu0 %v175
    %240 = vmatprep.subr.mxu0 0.0
    %241 = vmatpush2.msra.mxu0 0.0
    %242 = vmatprep.subr.mxu0 0.0
    %243 = vmatpush2.msra.mxu0 0.0
    %244 = vmatprep.subr.mxu0 0.0
    %245 = vmatpush2.msra.mxu0 0.0
    %246 = vmatprep.subr.mxu0 0.0
    %247 = vmatpush2.msra.mxu0 0.0
    %248 = vmatprep.subr.mxu0 0.0
    %249 = vmatpush2.msra.mxu0 0.0
    %250 = vmatprep.subr.mxu0 0.0
    %251 = vmatpush2.msra.mxu0 0.0
    %252 = vmatprep.subr.mxu0 0.0
    %253 = vmatpush2.msra.mxu0 0.0
    %254 = vmatprep.subr.mxu0 0.0
    %255 = vmatpush2.msra.mxu0 0.0
    %256 = vmatprep.subr.mxu0 0.0
    %257 = vmatpush2.msra.mxu0 0.0
    %258 = vmatprep.subr.mxu0 0.0
    %259 = vmatpush2.msra.mxu0 0.0
    %260 = vmatprep.subr.mxu0 0.0
    %261 = vmatpush2.msra.mxu0 0.0
    %262 = vmatprep.subr.mxu0 0.0
    %263 = vmatpush2.msra.mxu0 0.0
    %264 = vmatprep.subr.mxu0 0.0
    %265 = vmatpush2.msra.mxu0 0.0
    %266 = vmatprep.subr.mxu0 0.0
    %267 = vmatpush2.msra.mxu0 0.0
    %268 = vmatprep.subr.mxu0 0.0
    %269 = vmatpush2.msra.mxu0 0.0
    %270 = vmatprep.subr.mxu0 0.0
    %271 = vmatpush2.msra.mxu0 0.0
    %272 = vmatprep.mubr.f32.mxu0 0.0
    %273 = vmatmul.mubr.f32.gmra.mxu0 %v206
    %v274 = vpop.f32.mrf.mxu0
    %v275 = vadd.f32 0.0, %v274
    %v276 = vpop.f32.mrf.mxu0
    %277 = vdwg.mxu0
    %v278 = vadd.f32 %v204, %v275
    %v279 = vxor.u32 %v278, 2147483648
    %v280 = vmul.f32 %v279, 1.442695
    %v281 = vpow.pop %v280
    %v282 = vadd.f32 %v281, 1.0
    %v283 = vrcp.pop %v282
    %v284 = vmul.f32 1.0, %v283
    %v285 = vtanh.pop %v278
    %287 = vrot.lane.b32.xlu0 %v191, 32
    %v288 = vpop.permute.xlu0 %287
    %v290 = vmul.f32 %v284, %v288
    %292 = vrot.lane.b32.xlu0 %v285, 32
    %v293 = vpop.permute.xlu0 %292
    %v295 = vmul.f32 %v284, %v293
    %297 = vrot.lane.b32.xlu0 %v295, 32
    %v298 = vpop.permute.xlu0 %297
    %v300 = vadd.f32 %v290, %v298
    %v301 = vtanh.pop %v300
    %303 = vrot.lane.b32.xlu0 %v301, 32
    %v304 = vpop.permute.xlu0 %303
    %v306 = vmul.f32 %v284, %v304
    %308 = vrot.lane.b32.xlu0 %v306, 64
    %v309 = vpop.permute.xlu0 %308
    %311 = vst.msk [vmem:[#allocation3 + $0x2] sm:$0x3] %vm202, %v309
    %v312 = vld [vmem:[#allocation2 + $0x4] sm:$0x3]
    %v313 = vsel %vm205, %v309, 0
    %315 = vmatprep.subr.mxu0 0.0
    %316 = vmatpush1.msra.mxu0 0.0
    %317 = vmatprep.subr.mxu0 0.0
    %318 = vmatpush1.msra.mxu0 0.0
    %319 = vmatprep.subr.mxu0 0.0
    %320 = vmatpush1.msra.mxu0 0.0
    %321 = vmatprep.subr.mxu0 0.0
    %322 = vmatpush1.msra.mxu0 0.0
    %323 = vmatprep.subr.mxu0 0.0
    %324 = vmatpush1.msra.mxu0 0.0
    %325 = vmatprep.subr.mxu0 0.0
    %326 = vmatpush1.msra.mxu0 0.0
    %327 = vmatprep.subr.mxu0 0.0
    %328 = vmatpush1.msra.mxu0 0.0
    %329 = vmatprep.subr.mxu0 0.0
    %330 = vmatpush1.msra.mxu0 0.0
    %331 = vmatprep.subr.mxu0 0.0
    %332 = vmatpush1.msra.mxu0 0.0
    %333 = vmatprep.subr.mxu0 0.0
    %334 = vmatpush1.msra.mxu0 0.0
    %335 = vmatprep.subr.mxu0 0.0
    %336 = vmatpush1.msra.mxu0 0.0
    %337 = vmatprep.subr.mxu0 0.0
    %338 = vmatpush1.msra.mxu0 0.0
    %339 = vmatprep.subr.mxu0 0.0
    %340 = vmatpush1.msra.mxu0 %v178
    %341 = vmatprep.subr.mxu0 0.0
    %342 = vmatpush1.msra.mxu0 %v177
    %343 = vmatprep.subr.mxu0 0.0
    %344 = vmatpush1.msra.mxu0 %v176
    %345 = vmatprep.subr.mxu0 0.0
    %346 = vmatpush1.msra.mxu0 %v175
    %347 = vmatprep.subr.mxu0 0.0
    %348 = vmatpush2.msra.mxu0 0.0
    %349 = vmatprep.subr.mxu0 0.0
    %350 = vmatpush2.msra.mxu0 0.0
    %351 = vmatprep.subr.mxu0 0.0
    %352 = vmatpush2.msra.mxu0 0.0
    %353 = vmatprep.subr.mxu0 0.0
    %354 = vmatpush2.msra.mxu0 0.0
    %355 = vmatprep.subr.mxu0 0.0
    %356 = vmatpush2.msra.mxu0 0.0
    %357 = vmatprep.subr.mxu0 0.0
    %358 = vmatpush2.msra.mxu0 0.0
    %359 = vmatprep.subr.mxu0 0.0
    %360 = vmatpush2.msra.mxu0 0.0
    %361 = vmatprep.subr.mxu0 0.0
    %362 = vmatpush2.msra.mxu0 0.0
    %363 = vmatprep.subr.mxu0 0.0
    %364 = vmatpush2.msra.mxu0 0.0
    %365 = vmatprep.subr.mxu0 0.0
    %366 = vmatpush2.msra.mxu0 0.0
    %367 = vmatprep.subr.mxu0 0.0
    %368 = vmatpush2.msra.mxu0 0.0
    %369 = vmatprep.subr.mxu0 0.0
    %370 = vmatpush2.msra.mxu0 0.0
    %371 = vmatprep.subr.mxu0 0.0
    %372 = vmatpush2.msra.mxu0 0.0
    %373 = vmatprep.subr.mxu0 0.0
    %374 = vmatpush2.msra.mxu0 0.0
    %375 = vmatprep.subr.mxu0 0.0
    %376 = vmatpush2.msra.mxu0 0.0
    %377 = vmatprep.subr.mxu0 0.0
    %378 = vmatpush2.msra.mxu0 0.0
    %379 = vmatprep.mubr.f32.mxu0 0.0
    %380 = vmatmul.mubr.f32.gmra.mxu0 %v313
    %v381 = vpop.f32.mrf.mxu0
    %v382 = vadd.f32 0.0, %v381
    %v383 = vpop.f32.mrf.mxu0
    %384 = vdwg.mxu0
    %v385 = vadd.f32 %v312, %v382
    %v386 = vxor.u32 %v385, 2147483648
    %v387 = vmul.f32 %v386, 1.442695
    %v388 = vpow.pop %v387
    %v389 = vadd.f32 %v388, 1.0
    %v390 = vrcp.pop %v389
    %v391 = vmul.f32 1.0, %v390
    %v392 = vtanh.pop %v385
    %v393 = vmul.f32 %v391, %v300
    %395 = vrot.lane.b32.xlu0 %v392, 32
    %v396 = vpop.permute.xlu0 %395
    %v398 = vmul.f32 %v391, %v396
    %400 = vrot.lane.b32.xlu0 %v398, 32
    %v401 = vpop.permute.xlu0 %400
    %v403 = vadd.f32 %v393, %v401
    %v404 = vtanh.pop %v403
    %406 = vrot.lane.b32.xlu0 %v404, 32
    %v407 = vpop.permute.xlu0 %406
    %v409 = vmul.f32 %v391, %v407
    %411 = vrot.lane.b32.xlu0 %v409, 64
    %v412 = vpop.permute.xlu0 %411
    %414 = vst.msk [vmem:[#allocation3 + $0x4] sm:$0x3] %vm202, %v412
    %v415 = vld [vmem:[#allocation2 + $0x6] sm:$0x3]
    %v416 = vsel %vm205, %v412, 0
    %418 = vmatprep.subr.mxu0 0.0
    %419 = vmatpush1.msra.mxu0 0.0
    %420 = vmatprep.subr.mxu0 0.0
    %421 = vmatpush1.msra.mxu0 0.0
    %422 = vmatprep.subr.mxu0 0.0
    %423 = vmatpush1.msra.mxu0 0.0
    %424 = vmatprep.subr.mxu0 0.0
    %425 = vmatpush1.msra.mxu0 0.0
    %426 = vmatprep.subr.mxu0 0.0
    %427 = vmatpush1.msra.mxu0 0.0
    %428 = vmatprep.subr.mxu0 0.0
    %429 = vmatpush1.msra.mxu0 0.0
    %430 = vmatprep.subr.mxu0 0.0
    %431 = vmatpush1.msra.mxu0 0.0
    %432 = vmatprep.subr.mxu0 0.0
    %433 = vmatpush1.msra.mxu0 0.0
    %434 = vmatprep.subr.mxu0 0.0
    %435 = vmatpush1.msra.mxu0 0.0
    %436 = vmatprep.subr.mxu0 0.0
    %437 = vmatpush1.msra.mxu0 0.0
    %438 = vmatprep.subr.mxu0 0.0
    %439 = vmatpush1.msra.mxu0 0.0
    %440 = vmatprep.subr.mxu0 0.0
    %441 = vmatpush1.msra.mxu0 0.0
    %442 = vmatprep.subr.mxu0 0.0
    %443 = vmatpush1.msra.mxu0 %v178
    %444 = vmatprep.subr.mxu0 0.0
    %445 = vmatpush1.msra.mxu0 %v177
    %446 = vmatprep.subr.mxu0 0.0
    %447 = vmatpush1.msra.mxu0 %v176
    %448 = vmatprep.subr.mxu0 0.0
    %449 = vmatpush1.msra.mxu0 %v175
    %450 = vmatprep.subr.mxu0 0.0
    %451 = vmatpush2.msra.mxu0 0.0
    %452 = vmatprep.subr.mxu0 0.0
    %453 = vmatpush2.msra.mxu0 0.0
    %454 = vmatprep.subr.mxu0 0.0
    %455 = vmatpush2.msra.mxu0 0.0
    %456 = vmatprep.subr.mxu0 0.0
    %457 = vmatpush2.msra.mxu0 0.0
    %458 = vmatprep.subr.mxu0 0.0
    %459 = vmatpush2.msra.mxu0 0.0
    %460 = vmatprep.subr.mxu0 0.0
    %461 = vmatpush2.msra.mxu0 0.0
    %462 = vmatprep.subr.mxu0 0.0
    %463 = vmatpush2.msra.mxu0 0.0
    %464 = vmatprep.subr.mxu0 0.0
    %465 = vmatpush2.msra.mxu0 0.0
    %466 = vmatprep.subr.mxu0 0.0
    %467 = vmatpush2.msra.mxu0 0.0
    %468 = vmatprep.subr.mxu0 0.0
    %469 = vmatpush2.msra.mxu0 0.0
    %470 = vmatprep.subr.mxu0 0.0
    %471 = vmatpush2.msra.mxu0 0.0
    %472 = vmatprep.subr.mxu0 0.0
    %473 = vmatpush2.msra.mxu0 0.0
    %474 = vmatprep.subr.mxu0 0.0
    %475 = vmatpush2.msra.mxu0 0.0
    %476 = vmatprep.subr.mxu0 0.0
    %477 = vmatpush2.msra.mxu0 0.0
    %478 = vmatprep.subr.mxu0 0.0
    %479 = vmatpush2.msra.mxu0 0.0
    %480 = vmatprep.subr.mxu0 0.0
    %481 = vmatpush2.msra.mxu0 0.0
    %482 = vmatprep.mubr.f32.mxu0 0.0
    %483 = vmatmul.mubr.f32.gmra.mxu0 %v416
    %v484 = vpop.f32.mrf.mxu0
    %v485 = vadd.f32 0.0, %v484
    %v486 = vpop.f32.mrf.mxu0
    %487 = vdwg.mxu0
    %v488 = vadd.f32 %v415, %v485
    %v489 = vxor.u32 %v488, 2147483648
    %v490 = vmul.f32 %v489, 1.442695
    %v491 = vpow.pop %v490
    %v492 = vadd.f32 %v491, 1.0
    %v493 = vrcp.pop %v492
    %v494 = vmul.f32 1.0, %v493
    %v495 = vtanh.pop %v488
    %v496 = vmul.f32 %v494, %v403
    %498 = vrot.lane.b32.xlu0 %v495, 32
    %v499 = vpop.permute.xlu0 %498
    %v501 = vmul.f32 %v494, %v499
    %503 = vrot.lane.b32.xlu0 %v501, 32
    %v504 = vpop.permute.xlu0 %503
    %v506 = vadd.f32 %v496, %v504
    %v507 = vtanh.pop %v506
    %509 = vrot.lane.b32.xlu0 %v507, 32
    %v510 = vpop.permute.xlu0 %509
    %v512 = vmul.f32 %v494, %v510
    %514 = vrot.lane.b32.xlu0 %v512, 64
    %v515 = vpop.permute.xlu0 %514
    %517 = vst.msk [vmem:[#allocation3 + $0x6] sm:$0x3] %vm202, %v515
    %v518 = vld [vmem:[#allocation2 + $0x8] sm:$0x3]
    %v519 = vsel %vm205, %v515, 0
    %521 = vmatprep.subr.mxu0 0.0
    %522 = vmatpush1.msra.mxu0 0.0
    %523 = vmatprep.subr.mxu0 0.0
    %524 = vmatpush1.msra.mxu0 0.0
    %525 = vmatprep.subr.mxu0 0.0
    %526 = vmatpush1.msra.mxu0 0.0
    %527 = vmatprep.subr.mxu0 0.0
    %528 = vmatpush1.msra.mxu0 0.0
    %529 = vmatprep.subr.mxu0 0.0
    %530 = vmatpush1.msra.mxu0 0.0
    %531 = vmatprep.subr.mxu0 0.0
    %532 = vmatpush1.msra.mxu0 0.0
    %533 = vmatprep.subr.mxu0 0.0
    %534 = vmatpush1.msra.mxu0 0.0
    %535 = vmatprep.subr.mxu0 0.0
    %536 = vmatpush1.msra.mxu0 0.0
    %537 = vmatprep.subr.mxu0 0.0
    %538 = vmatpush1.msra.mxu0 0.0
    %539 = vmatprep.subr.mxu0 0.0
    %540 = vmatpush1.msra.mxu0 0.0
    %541 = vmatprep.subr.mxu0 0.0
    %542 = vmatpush1.msra.mxu0 0.0
    %543 = vmatprep.subr.mxu0 0.0
    %544 = vmatpush1.msra.mxu0 0.0
    %545 = vmatprep.subr.mxu0 0.0
    %546 = vmatpush1.msra.mxu0 %v178
    %547 = vmatprep.subr.mxu0 0.0
    %548 = vmatpush1.msra.mxu0 %v177
    %549 = vmatprep.subr.mxu0 0.0
    %550 = vmatpush1.msra.mxu0 %v176
    %551 = vmatprep.subr.mxu0 0.0
    %552 = vmatpush1.msra.mxu0 %v175
    %553 = vmatprep.subr.mxu0 0.0
    %554 = vmatpush2.msra.mxu0 0.0
    %555 = vmatprep.subr.mxu0 0.0
    %556 = vmatpush2.msra.mxu0 0.0
    %557 = vmatprep.subr.mxu0 0.0
    %558 = vmatpush2.msra.mxu0 0.0
    %559 = vmatprep.subr.mxu0 0.0
    %560 = vmatpush2.msra.mxu0 0.0
    %561 = vmatprep.subr.mxu0 0.0
    %562 = vmatpush2.msra.mxu0 0.0
    %563 = vmatprep.subr.mxu0 0.0
    %564 = vmatpush2.msra.mxu0 0.0
    %565 = vmatprep.subr.mxu0 0.0
    %566 = vmatpush2.msra.mxu0 0.0
    %567 = vmatprep.subr.mxu0 0.0
    %568 = vmatpush2.msra.mxu0 0.0
    %569 = vmatprep.subr.mxu0 0.0
    %570 = vmatpush2.msra.mxu0 0.0
    %571 = vmatprep.subr.mxu0 0.0
    %572 = vmatpush2.msra.mxu0 0.0
    %573 = vmatprep.subr.mxu0 0.0
    %574 = vmatpush2.msra.mxu0 0.0
    %575 = vmatprep.subr.mxu0 0.0
    %576 = vmatpush2.msra.mxu0 0.0
    %577 = vmatprep.subr.mxu0 0.0
    %578 = vmatpush2.msra.mxu0 0.0
    %579 = vmatprep.subr.mxu0 0.0
    %580 = vmatpush2.msra.mxu0 0.0
    %581 = vmatprep.subr.mxu0 0.0
    %582 = vmatpush2.msra.mxu0 0.0
    %583 = vmatprep.subr.mxu0 0.0
    %584 = vmatpush2.msra.mxu0 0.0
    %585 = vmatprep.mubr.f32.mxu0 0.0
    %586 = vmatmul.mubr.f32.gmra.mxu0 %v519
    %v587 = vpop.f32.mrf.mxu0
    %v588 = vadd.f32 0.0, %v587
    %v589 = vpop.f32.mrf.mxu0
    %590 = vdwg.mxu0
    %v591 = vadd.f32 %v518, %v588
    %v592 = vxor.u32 %v591, 2147483648
    %v593 = vmul.f32 %v592, 1.442695
    %v594 = vpow.pop %v593
    %v595 = vadd.f32 %v594, 1.0
    %v596 = vrcp.pop %v595
    %v597 = vmul.f32 1.0, %v596
    %v598 = vtanh.pop %v591
    %v599 = vmul.f32 %v597, %v506
    %601 = vrot.lane.b32.xlu0 %v598, 32
    %v602 = vpop.permute.xlu0 %601
    %v604 = vmul.f32 %v597, %v602
    %606 = vrot.lane.b32.xlu0 %v604, 32
    %v607 = vpop.permute.xlu0 %606
    %v609 = vadd.f32 %v599, %v607
    %v610 = vtanh.pop %v609
    %612 = vrot.lane.b32.xlu0 %v610, 32
    %v613 = vpop.permute.xlu0 %612
    %v615 = vmul.f32 %v597, %v613
    %617 = vrot.lane.b32.xlu0 %v615, 64
    %v618 = vpop.permute.xlu0 %617
    %620 = vst.msk [vmem:[#allocation3 + $0x8] sm:$0x3] %vm202, %v618
    %v621 = vld [vmem:[#allocation2 + $0xa] sm:$0x3]
    %v622 = vsel %vm205, %v618, 0
    %624 = vmatprep.subr.mxu0 0.0
    %625 = vmatpush1.msra.mxu0 0.0
    %626 = vmatprep.subr.mxu0 0.0
    %627 = vmatpush1.msra.mxu0 0.0
    %628 = vmatprep.subr.mxu0 0.0
    %629 = vmatpush1.msra.mxu0 0.0
    %630 = vmatprep.subr.mxu0 0.0
    %631 = vmatpush1.msra.mxu0 0.0
    %632 = vmatprep.subr.mxu0 0.0
    %633 = vmatpush1.msra.mxu0 0.0
    %634 = vmatprep.subr.mxu0 0.0
    %635 = vmatpush1.msra.mxu0 0.0
    %636 = vmatprep.subr.mxu0 0.0
    %637 = vmatpush1.msra.mxu0 0.0
    %638 = vmatprep.subr.mxu0 0.0
    %639 = vmatpush1.msra.mxu0 0.0
    %640 = vmatprep.subr.mxu0 0.0
    %641 = vmatpush1.msra.mxu0 0.0
    %642 = vmatprep.subr.mxu0 0.0
    %643 = vmatpush1.msra.mxu0 0.0
    %644 = vmatprep.subr.mxu0 0.0
    %645 = vmatpush1.msra.mxu0 0.0
    %646 = vmatprep.subr.mxu0 0.0
    %647 = vmatpush1.msra.mxu0 0.0
    %648 = vmatprep.subr.mxu0 0.0
    %649 = vmatpush1.msra.mxu0 %v178
    %650 = vmatprep.subr.mxu0 0.0
    %651 = vmatpush1.msra.mxu0 %v177
    %652 = vmatprep.subr.mxu0 0.0
    %653 = vmatpush1.msra.mxu0 %v176
    %654 = vmatprep.subr.mxu0 0.0
    %655 = vmatpush1.msra.mxu0 %v175
    %656 = vmatprep.subr.mxu0 0.0
    %657 = vmatpush2.msra.mxu0 0.0
    %658 = vmatprep.subr.mxu0 0.0
    %659 = vmatpush2.msra.mxu0 0.0
    %660 = vmatprep.subr.mxu0 0.0
    %661 = vmatpush2.msra.mxu0 0.0
    %662 = vmatprep.subr.mxu0 0.0
    %663 = vmatpush2.msra.mxu0 0.0
    %664 = vmatprep.subr.mxu0 0.0
    %665 = vmatpush2.msra.mxu0 0.0
    %666 = vmatprep.subr.mxu0 0.0
    %667 = vmatpush2.msra.mxu0 0.0
    %668 = vmatprep.subr.mxu0 0.0
    %669 = vmatpush2.msra.mxu0 0.0
    %670 = vmatprep.subr.mxu0 0.0
    %671 = vmatpush2.msra.mxu0 0.0
    %672 = vmatprep.subr.mxu0 0.0
    %673 = vmatpush2.msra.mxu0 0.0
    %674 = vmatprep.subr.mxu0 0.0
    %675 = vmatpush2.msra.mxu0 0.0
    %676 = vmatprep.subr.mxu0 0.0
    %677 = vmatpush2.msra.mxu0 0.0
    %678 = vmatprep.subr.mxu0 0.0
    %679 = vmatpush2.msra.mxu0 0.0
    %680 = vmatprep.subr.mxu0 0.0
    %681 = vmatpush2.msra.mxu0 0.0
    %682 = vmatprep.subr.mxu0 0.0
    %683 = vmatpush2.msra.mxu0 0.0
    %684 = vmatprep.subr.mxu0 0.0
    %685 = vmatpush2.msra.mxu0 0.0
    %686 = vmatprep.subr.mxu0 0.0
    %687 = vmatpush2.msra.mxu0 0.0
    %688 = vmatprep.mubr.f32.mxu0 0.0
    %689 = vmatmul.mubr.f32.gmra.mxu0 %v622
    %v690 = vpop.f32.mrf.mxu0
    %v691 = vadd.f32 0.0, %v690
    %v692 = vpop.f32.mrf.mxu0
    %693 = vdwg.mxu0
    %v694 = vadd.f32 %v621, %v691
    %v695 = vxor.u32 %v694, 2147483648
    %v696 = vmul.f32 %v695, 1.442695
    %v697 = vpow.pop %v696
    %v698 = vadd.f32 %v697, 1.0
    %v699 = vrcp.pop %v698
    %v700 = vmul.f32 1.0, %v699
    %v701 = vtanh.pop %v694
    %v702 = vmul.f32 %v700, %v609
    %704 = vrot.lane.b32.xlu0 %v701, 32
    %v705 = vpop.permute.xlu0 %704
    %v707 = vmul.f32 %v700, %v705
    %709 = vrot.lane.b32.xlu0 %v707, 32
    %v710 = vpop.permute.xlu0 %709
    %v712 = vadd.f32 %v702, %v710
    %v713 = vtanh.pop %v712
    %715 = vrot.lane.b32.xlu0 %v713, 32
    %v716 = vpop.permute.xlu0 %715
    %v718 = vmul.f32 %v700, %v716
    %720 = vrot.lane.b32.xlu0 %v718, 64
    %v721 = vpop.permute.xlu0 %720
    %723 = vst.msk [vmem:[#allocation3 + $0xa] sm:$0x3] %vm202, %v721
    %v724 = vld [vmem:[#allocation2 + $0xc] sm:$0x3]
    %v725 = vsel %vm205, %v721, 0
    %727 = vmatprep.subr.mxu0 0.0
    %728 = vmatpush1.msra.mxu0 0.0
    %729 = vmatprep.subr.mxu0 0.0
    %730 = vmatpush1.msra.mxu0 0.0
    %731 = vmatprep.subr.mxu0 0.0
    %732 = vmatpush1.msra.mxu0 0.0
    %733 = vmatprep.subr.mxu0 0.0
    %734 = vmatpush1.msra.mxu0 0.0
    %735 = vmatprep.subr.mxu0 0.0
    %736 = vmatpush1.msra.mxu0 0.0
    %737 = vmatprep.subr.mxu0 0.0
    %738 = vmatpush1.msra.mxu0 0.0
    %739 = vmatprep.subr.mxu0 0.0
    %740 = vmatpush1.msra.mxu0 0.0
    %741 = vmatprep.subr.mxu0 0.0
    %742 = vmatpush1.msra.mxu0 0.0
    %743 = vmatprep.subr.mxu0 0.0
    %744 = vmatpush1.msra.mxu0 0.0
    %745 = vmatprep.subr.mxu0 0.0
    %746 = vmatpush1.msra.mxu0 0.0
    %747 = vmatprep.subr.mxu0 0.0
    %748 = vmatpush1.msra.mxu0 0.0
    %749 = vmatprep.subr.mxu0 0.0
    %750 = vmatpush1.msra.mxu0 0.0
    %751 = vmatprep.subr.mxu0 0.0
    %752 = vmatpush1.msra.mxu0 %v178
    %753 = vmatprep.subr.mxu0 0.0
    %754 = vmatpush1.msra.mxu0 %v177
    %755 = vmatprep.subr.mxu0 0.0
    %756 = vmatpush1.msra.mxu0 %v176
    %757 = vmatprep.subr.mxu0 0.0
    %758 = vmatpush1.msra.mxu0 %v175
    %759 = vmatprep.subr.mxu0 0.0
    %760 = vmatpush2.msra.mxu0 0.0
    %761 = vmatprep.subr.mxu0 0.0
    %762 = vmatpush2.msra.mxu0 0.0
    %763 = vmatprep.subr.mxu0 0.0
    %764 = vmatpush2.msra.mxu0 0.0
    %765 = vmatprep.subr.mxu0 0.0
    %766 = vmatpush2.msra.mxu0 0.0
    %767 = vmatprep.subr.mxu0 0.0
    %768 = vmatpush2.msra.mxu0 0.0
    %769 = vmatprep.subr.mxu0 0.0
    %770 = vmatpush2.msra.mxu0 0.0
    %771 = vmatprep.subr.mxu0 0.0
    %772 = vmatpush2.msra.mxu0 0.0
    %773 = vmatprep.subr.mxu0 0.0
    %774 = vmatpush2.msra.mxu0 0.0
    %775 = vmatprep.subr.mxu0 0.0
    %776 = vmatpush2.msra.mxu0 0.0
    %777 = vmatprep.subr.mxu0 0.0
    %778 = vmatpush2.msra.mxu0 0.0
    %779 = vmatprep.subr.mxu0 0.0
    %780 = vmatpush2.msra.mxu0 0.0
    %781 = vmatprep.subr.mxu0 0.0
    %782 = vmatpush2.msra.mxu0 0.0
    %783 = vmatprep.subr.mxu0 0.0
    %784 = vmatpush2.msra.mxu0 0.0
    %785 = vmatprep.subr.mxu0 0.0
    %786 = vmatpush2.msra.mxu0 0.0
    %787 = vmatprep.subr.mxu0 0.0
    %788 = vmatpush2.msra.mxu0 0.0
    %789 = vmatprep.subr.mxu0 0.0
    %790 = vmatpush2.msra.mxu0 0.0
    %791 = vmatprep.mubr.f32.mxu0 0.0
    %792 = vmatmul.mubr.f32.gmra.mxu0 %v725
    %v793 = vpop.f32.mrf.mxu0
    %v794 = vadd.f32 0.0, %v793
    %v795 = vpop.f32.mrf.mxu0
    %796 = vdwg.mxu0
    %v797 = vadd.f32 %v724, %v794
    %v798 = vxor.u32 %v797, 2147483648
    %v799 = vmul.f32 %v798, 1.442695
    %v800 = vpow.pop %v799
    %v801 = vadd.f32 %v800, 1.0
    %v802 = vrcp.pop %v801
    %v803 = vmul.f32 1.0, %v802
    %v804 = vtanh.pop %v797
    %v805 = vmul.f32 %v803, %v712
    %807 = vrot.lane.b32.xlu0 %v804, 32
    %v808 = vpop.permute.xlu0 %807
    %v810 = vmul.f32 %v803, %v808
    %812 = vrot.lane.b32.xlu0 %v810, 32
    %v813 = vpop.permute.xlu0 %812
    %v815 = vadd.f32 %v805, %v813
    %v816 = vtanh.pop %v815
    %818 = vrot.lane.b32.xlu0 %v816, 32
    %v819 = vpop.permute.xlu0 %818
    %v821 = vmul.f32 %v803, %v819
    %823 = vrot.lane.b32.xlu0 %v821, 64
    %v824 = vpop.permute.xlu0 %823
    %826 = vst.msk [vmem:[#allocation3 + $0xc] sm:$0x3] %vm202, %v824
    %v827 = vld [vmem:[#allocation2 + $0xe] sm:$0x3]
    %v828 = vsel %vm205, %v824, 0
    %830 = vmatprep.subr.mxu0 0.0
    %831 = vmatpush1.msra.mxu0 0.0
    %832 = vmatprep.subr.mxu0 0.0
    %833 = vmatpush1.msra.mxu0 0.0
    %834 = vmatprep.subr.mxu0 0.0
    %835 = vmatpush1.msra.mxu0 0.0
    %836 = vmatprep.subr.mxu0 0.0
    %837 = vmatpush1.msra.mxu0 0.0
    %838 = vmatprep.subr.mxu0 0.0
    %839 = vmatpush1.msra.mxu0 0.0
    %840 = vmatprep.subr.mxu0 0.0
    %841 = vmatpush1.msra.mxu0 0.0
    %842 = vmatprep.subr.mxu0 0.0
    %843 = vmatpush1.msra.mxu0 0.0
    %844 = vmatprep.subr.mxu0 0.0
    %845 = vmatpush1.msra.mxu0 0.0
    %846 = vmatprep.subr.mxu0 0.0
    %847 = vmatpush1.msra.mxu0 0.0
    %848 = vmatprep.subr.mxu0 0.0
    %849 = vmatpush1.msra.mxu0 0.0
    %850 = vmatprep.subr.mxu0 0.0
    %851 = vmatpush1.msra.mxu0 0.0
    %852 = vmatprep.subr.mxu0 0.0
    %853 = vmatpush1.msra.mxu0 0.0
    %854 = vmatprep.subr.mxu0 0.0
    %855 = vmatpush1.msra.mxu0 %v178
    %856 = vmatprep.subr.mxu0 0.0
    %857 = vmatpush1.msra.mxu0 %v177
    %858 = vmatprep.subr.mxu0 0.0
    %859 = vmatpush1.msra.mxu0 %v176
    %860 = vmatprep.subr.mxu0 0.0
    %861 = vmatpush1.msra.mxu0 %v175
    %862 = vmatprep.subr.mxu0 0.0
    %863 = vmatpush2.msra.mxu0 0.0
    %864 = vmatprep.subr.mxu0 0.0
    %865 = vmatpush2.msra.mxu0 0.0
    %866 = vmatprep.subr.mxu0 0.0
    %867 = vmatpush2.msra.mxu0 0.0
    %868 = vmatprep.subr.mxu0 0.0
    %869 = vmatpush2.msra.mxu0 0.0
    %870 = vmatprep.subr.mxu0 0.0
    %871 = vmatpush2.msra.mxu0 0.0
    %872 = vmatprep.subr.mxu0 0.0
    %873 = vmatpush2.msra.mxu0 0.0
    %874 = vmatprep.subr.mxu0 0.0
    %875 = vmatpush2.msra.mxu0 0.0
    %876 = vmatprep.subr.mxu0 0.0
    %877 = vmatpush2.msra.mxu0 0.0
    %878 = vmatprep.subr.mxu0 0.0
    %879 = vmatpush2.msra.mxu0 0.0
    %880 = vmatprep.subr.mxu0 0.0
    %881 = vmatpush2.msra.mxu0 0.0
    %882 = vmatprep.subr.mxu0 0.0
    %883 = vmatpush2.msra.mxu0 0.0
    %884 = vmatprep.subr.mxu0 0.0
    %885 = vmatpush2.msra.mxu0 0.0
    %886 = vmatprep.subr.mxu0 0.0
    %887 = vmatpush2.msra.mxu0 0.0
    %888 = vmatprep.subr.mxu0 0.0
    %889 = vmatpush2.msra.mxu0 0.0
    %890 = vmatprep.subr.mxu0 0.0
    %891 = vmatpush2.msra.mxu0 0.0
    %892 = vmatprep.subr.mxu0 0.0
    %893 = vmatpush2.msra.mxu0 0.0
    %894 = vmatprep.mubr.f32.mxu0 0.0
    %895 = vmatmul.mubr.f32.gmra.mxu0 %v828
    %v896 = vpop.f32.mrf.mxu0
    %v897 = vadd.f32 0.0, %v896
    %v898 = vpop.f32.mrf.mxu0
    %899 = vdwg.mxu0
    %v900 = vadd.f32 %v827, %v897
    %v901 = vxor.u32 %v900, 2147483648
    %v902 = vmul.f32 %v901, 1.442695
    %v903 = vpow.pop %v902
    %v904 = vadd.f32 %v903, 1.0
    %v905 = vrcp.pop %v904
    %v906 = vmul.f32 1.0, %v905
    %v907 = vtanh.pop %v900
    %v908 = vmul.f32 %v906, %v815
    %910 = vrot.lane.b32.xlu0 %v907, 32
    %v911 = vpop.permute.xlu0 %910
    %v913 = vmul.f32 %v906, %v911
    %915 = vrot.lane.b32.xlu0 %v913, 32
    %v916 = vpop.permute.xlu0 %915
    %v918 = vadd.f32 %v908, %v916
    %v919 = vtanh.pop %v918
    %921 = vrot.lane.b32.xlu0 %v919, 32
    %v922 = vpop.permute.xlu0 %921
    %v924 = vmul.f32 %v906, %v922
    %926 = vrot.lane.b32.xlu0 %v924, 64
    %v927 = vpop.permute.xlu0 %926
    %929 = vst.msk [vmem:[#allocation3 + $0xe] sm:$0x3] %vm202, %v927
    %v930 = vld [vmem:[#allocation3] sm:$0xff]
    %v931 = vld [vmem:[#allocation3 + $0x8] sm:$0xff]
    %v932 = vld [vmem:[%s4] sm:$0xff]
    %v933 = vld [vmem:[%s4 + $0x8] sm:$0xff]
    %v934 = vld [vmem:[%s4 + $0x10] sm:$0xff]
    %v935 = vld [vmem:[%s4 + $0x18] sm:$0xff]
    %v936 = vld [vmem:[#allocation9] sm:$0x1]
    %v938 = vlaneseq
    %v939 = vshrl.u32 %v938, 7
    %v940 = vsub.s32 0, %v939
    %v941 = vrot.slane %v936, %v940
    %v944 = vsel %vm205, %v930, 0
    %v947 = vsel %vm205, %v931, 0
    %949 = vmatprep.subr.mxu0 0.0
    %950 = vmatpush1.msra.mxu0 0.0
    %951 = vmatprep.subr.mxu0 0.0
    %952 = vmatpush1.msra.mxu0 0.0
    %953 = vmatprep.subr.mxu0 0.0
    %954 = vmatpush1.msra.mxu0 0.0
    %955 = vmatprep.subr.mxu0 0.0
    %956 = vmatpush1.msra.mxu0 0.0
    %957 = vmatprep.subr.mxu0 0.0
    %958 = vmatpush1.msra.mxu0 0.0
    %959 = vmatprep.subr.mxu0 0.0
    %960 = vmatpush1.msra.mxu0 0.0
    %961 = vmatprep.subr.mxu0 0.0
    %962 = vmatpush1.msra.mxu0 0.0
    %963 = vmatprep.subr.mxu0 0.0
    %964 = vmatpush1.msra.mxu0 0.0
    %965 = vmatprep.subr.mxu0 0.0
    %966 = vmatpush1.msra.mxu0 0.0
    %967 = vmatprep.subr.mxu0 0.0
    %968 = vmatpush1.msra.mxu0 0.0
    %969 = vmatprep.subr.mxu0 0.0
    %970 = vmatpush1.msra.mxu0 0.0
    %971 = vmatprep.subr.mxu0 0.0
    %972 = vmatpush1.msra.mxu0 0.0
    %973 = vmatprep.subr.mxu0 0.0
    %974 = vmatpush1.msra.mxu0 %v935
    %975 = vmatprep.subr.mxu0 0.0
    %976 = vmatpush1.msra.mxu0 %v934
    %977 = vmatprep.subr.mxu0 0.0
    %978 = vmatpush1.msra.mxu0 %v933
    %979 = vmatprep.subr.mxu0 0.0
    %980 = vmatpush1.msra.mxu0 %v932
    %981 = vmatprep.subr.mxu0 0.0
    %982 = vmatpush2.msra.mxu0 0.0
    %983 = vmatprep.subr.mxu0 0.0
    %984 = vmatpush2.msra.mxu0 0.0
    %985 = vmatprep.subr.mxu0 0.0
    %986 = vmatpush2.msra.mxu0 0.0
    %987 = vmatprep.subr.mxu0 0.0
    %988 = vmatpush2.msra.mxu0 0.0
    %989 = vmatprep.subr.mxu0 0.0
    %990 = vmatpush2.msra.mxu0 0.0
    %991 = vmatprep.subr.mxu0 0.0
    %992 = vmatpush2.msra.mxu0 0.0
    %993 = vmatprep.subr.mxu0 0.0
    %994 = vmatpush2.msra.mxu0 0.0
    %995 = vmatprep.subr.mxu0 0.0
    %996 = vmatpush2.msra.mxu0 0.0
    %997 = vmatprep.subr.mxu0 0.0
    %998 = vmatpush2.msra.mxu0 0.0
    %999 = vmatprep.subr.mxu0 0.0
    %1000 = vmatpush2.msra.mxu0 0.0
    %1001 = vmatprep.subr.mxu0 0.0
    %1002 = vmatpush2.msra.mxu0 0.0
    %1003 = vmatprep.subr.mxu0 0.0
    %1004 = vmatpush2.msra.mxu0 0.0
    %1005 = vmatprep.subr.mxu0 0.0
    %1006 = vmatpush2.msra.mxu0 0.0
    %1007 = vmatprep.subr.mxu0 0.0
    %1008 = vmatpush2.msra.mxu0 0.0
    %1009 = vmatprep.subr.mxu0 0.0
    %1010 = vmatpush2.msra.mxu0 0.0
    %1011 = vmatprep.subr.mxu0 0.0
    %1012 = vmatpush2.msra.mxu0 0.0
    %1013 = vmatprep.mubr.f32.mxu0 0.0
    %1014 = vmatmul.mubr.f32.gmra.mxu0 %v944
    %v1015 = vpop.f32.mrf.mxu0
    %v1016 = vadd.f32 %v941, %v1015
    %v1017 = vpop.f32.mrf.mxu0
    %1018 = vmatprep.mubr.f32.mxu0 0.0
    %1019 = vmatmul.mubr.f32.gmra.mxu0 %v947
    %v1020 = vpop.f32.mrf.mxu0
    %v1021 = vadd.f32 %v941, %v1020
    %v1022 = vpop.f32.mrf.mxu0
    %1023 = vdwg.mxu0
    %1024 = vst [vmem:[#allocation2] sm:$0xff] %v1016
    %1025 = vst [vmem:[#allocation2 + $0x8] sm:$0xff] %v1021
    %v1026 = vld [vmem:[#allocation8] sm:$0xff]
    %v1027 = vld [vmem:[#allocation8 + $0x8] sm:$0xff]
    %v1028 = vld [vmem:[#allocation8 + $0x10] sm:$0xff]
    %v1029 = vld [vmem:[#allocation8 + $0x18] sm:$0xff]
    %v1030 = vld [vmem:[#allocation2] sm:$0x3]
    %v1031 = vxor.u32 %v1030, 2147483648
    %v1032 = vmul.f32 %v1031, 1.442695
    %v1033 = vpow.pop %v1032
    %v1034 = vadd.f32 %v1033, 1.0
    %v1035 = vrcp.pop %v1034
    %v1036 = vmul.f32 1.0, %v1035
    %v1037 = vtanh.pop %v1030
    %1039 = vrot.lane.b32.xlu0 %v1037, 32
    %v1040 = vpop.permute.xlu0 %1039
    %v1042 = vmul.f32 %v1036, %v1040
    %v1043 = vtanh.pop %v1042
    %1045 = vrot.lane.b32.xlu0 %v1043, 64
    %v1046 = vpop.permute.xlu0 %1045
    %v1048 = vmul.f32 %v1036, %v1046
    %1050 = vrot.lane.b32.xlu0 %v1048, 64
    %v1051 = vpop.permute.xlu0 %1050
    %1053 = vst.msk [vmem:[%s7] sm:$0x3] %vm202, %v1051
    %v1054 = vld [vmem:[#allocation2 + $0x2] sm:$0x3]
    %v1055 = vsel %vm205, %v1051, 0
    %1057 = vmatprep.subr.mxu0 0.0
    %1058 = vmatpush1.msra.mxu0 0.0
    %1059 = vmatprep.subr.mxu0 0.0
    %1060 = vmatpush1.msra.mxu0 0.0
    %1061 = vmatprep.subr.mxu0 0.0
    %1062 = vmatpush1.msra.mxu0 0.0
    %1063 = vmatprep.subr.mxu0 0.0
    %1064 = vmatpush1.msra.mxu0 0.0
    %1065 = vmatprep.subr.mxu0 0.0
    %1066 = vmatpush1.msra.mxu0 0.0
    %1067 = vmatprep.subr.mxu0 0.0
    %1068 = vmatpush1.msra.mxu0 0.0
    %1069 = vmatprep.subr.mxu0 0.0
    %1070 = vmatpush1.msra.mxu0 0.0
    %1071 = vmatprep.subr.mxu0 0.0
    %1072 = vmatpush1.msra.mxu0 0.0
    %1073 = vmatprep.subr.mxu0 0.0
    %1074 = vmatpush1.msra.mxu0 0.0
    %1075 = vmatprep.subr.mxu0 0.0
    %1076 = vmatpush1.msra.mxu0 0.0
    %1077 = vmatprep.subr.mxu0 0.0
    %1078 = vmatpush1.msra.mxu0 0.0
    %1079 = vmatprep.subr.mxu0 0.0
    %1080 = vmatpush1.msra.mxu0 0.0
    %1081 = vmatprep.subr.mxu0 0.0
    %1082 = vmatpush1.msra.mxu0 %v1029
    %1083 = vmatprep.subr.mxu0 0.0
    %1084 = vmatpush1.msra.mxu0 %v1028
    %1085 = vmatprep.subr.mxu0 0.0
    %1086 = vmatpush1.msra.mxu0 %v1027
    %1087 = vmatprep.subr.mxu0 0.0
    %1088 = vmatpush1.msra.mxu0 %v1026
    %1089 = vmatprep.subr.mxu0 0.0
    %1090 = vmatpush2.msra.mxu0 0.0
    %1091 = vmatprep.subr.mxu0 0.0
    %1092 = vmatpush2.msra.mxu0 0.0
    %1093 = vmatprep.subr.mxu0 0.0
    %1094 = vmatpush2.msra.mxu0 0.0
    %1095 = vmatprep.subr.mxu0 0.0
    %1096 = vmatpush2.msra.mxu0 0.0
    %1097 = vmatprep.subr.mxu0 0.0
    %1098 = vmatpush2.msra.mxu0 0.0
    %1099 = vmatprep.subr.mxu0 0.0
    %1100 = vmatpush2.msra.mxu0 0.0
    %1101 = vmatprep.subr.mxu0 0.0
    %1102 = vmatpush2.msra.mxu0 0.0
    %1103 = vmatprep.subr.mxu0 0.0
    %1104 = vmatpush2.msra.mxu0 0.0
    %1105 = vmatprep.subr.mxu0 0.0
    %1106 = vmatpush2.msra.mxu0 0.0
    %1107 = vmatprep.subr.mxu0 0.0
    %1108 = vmatpush2.msra.mxu0 0.0
    %1109 = vmatprep.subr.mxu0 0.0
    %1110 = vmatpush2.msra.mxu0 0.0
    %1111 = vmatprep.subr.mxu0 0.0
    %1112 = vmatpush2.msra.mxu0 0.0
    %1113 = vmatprep.subr.mxu0 0.0
    %1114 = vmatpush2.msra.mxu0 0.0
    %1115 = vmatprep.subr.mxu0 0.0
    %1116 = vmatpush2.msra.mxu0 0.0
    %1117 = vmatprep.subr.mxu0 0.0
    %1118 = vmatpush2.msra.mxu0 0.0
    %1119 = vmatprep.subr.mxu0 0.0
    %1120 = vmatpush2.msra.mxu0 0.0
    %1121 = vmatprep.mubr.f32.mxu0 0.0
    %1122 = vmatmul.mubr.f32.gmra.mxu0 %v1055
    %v1123 = vpop.f32.mrf.mxu0
    %v1124 = vadd.f32 0.0, %v1123
    %v1125 = vpop.f32.mrf.mxu0
    %1126 = vdwg.mxu0
    %v1127 = vadd.f32 %v1054, %v1124
    %v1128 = vxor.u32 %v1127, 2147483648
    %v1129 = vmul.f32 %v1128, 1.442695
    %v1130 = vpow.pop %v1129
    %v1131 = vadd.f32 %v1130, 1.0
    %v1132 = vrcp.pop %v1131
    %v1133 = vmul.f32 1.0, %v1132
    %v1134 = vtanh.pop %v1127
    %1136 = vrot.lane.b32.xlu0 %v1042, 32
    %v1137 = vpop.permute.xlu0 %1136
    %v1139 = vmul.f32 %v1133, %v1137
    %1141 = vrot.lane.b32.xlu0 %v1134, 32
    %v1142 = vpop.permute.xlu0 %1141
    %v1144 = vmul.f32 %v1133, %v1142
    %1146 = vrot.lane.b32.xlu0 %v1144, 32
    %v1147 = vpop.permute.xlu0 %1146
    %v1149 = vadd.f32 %v1139, %v1147
    %v1150 = vtanh.pop %v1149
    %1152 = vrot.lane.b32.xlu0 %v1150, 32
    %v1153 = vpop.permute.xlu0 %1152
    %v1155 = vmul.f32 %v1133, %v1153
    %1157 = vrot.lane.b32.xlu0 %v1155, 64
    %v1158 = vpop.permute.xlu0 %1157
    %1160 = vst.msk [vmem:[%s7 + $0x2] sm:$0x3] %vm202, %v1158
    %v1161 = vld [vmem:[#allocation2 + $0x4] sm:$0x3]
    %v1162 = vsel %vm205, %v1158, 0
    %1164 = vmatprep.subr.mxu0 0.0
    %1165 = vmatpush1.msra.mxu0 0.0
    %1166 = vmatprep.subr.mxu0 0.0
    %1167 = vmatpush1.msra.mxu0 0.0
    %1168 = vmatprep.subr.mxu0 0.0
    %1169 = vmatpush1.msra.mxu0 0.0
    %1170 = vmatprep.subr.mxu0 0.0
    %1171 = vmatpush1.msra.mxu0 0.0
    %1172 = vmatprep.subr.mxu0 0.0
    %1173 = vmatpush1.msra.mxu0 0.0
    %1174 = vmatprep.subr.mxu0 0.0
    %1175 = vmatpush1.msra.mxu0 0.0
    %1176 = vmatprep.subr.mxu0 0.0
    %1177 = vmatpush1.msra.mxu0 0.0
    %1178 = vmatprep.subr.mxu0 0.0
    %1179 = vmatpush1.msra.mxu0 0.0
    %1180 = vmatprep.subr.mxu0 0.0
    %1181 = vmatpush1.msra.mxu0 0.0
    %1182 = vmatprep.subr.mxu0 0.0
    %1183 = vmatpush1.msra.mxu0 0.0
    %1184 = vmatprep.subr.mxu0 0.0
    %1185 = vmatpush1.msra.mxu0 0.0
    %1186 = vmatprep.subr.mxu0 0.0
    %1187 = vmatpush1.msra.mxu0 0.0
    %1188 = vmatprep.subr.mxu0 0.0
    %1189 = vmatpush1.msra.mxu0 %v1029
    %1190 = vmatprep.subr.mxu0 0.0
    %1191 = vmatpush1.msra.mxu0 %v1028
    %1192 = vmatprep.subr.mxu0 0.0
    %1193 = vmatpush1.msra.mxu0 %v1027
    %1194 = vmatprep.subr.mxu0 0.0
    %1195 = vmatpush1.msra.mxu0 %v1026
    %1196 = vmatprep.subr.mxu0 0.0
    %1197 = vmatpush2.msra.mxu0 0.0
    %1198 = vmatprep.subr.mxu0 0.0
    %1199 = vmatpush2.msra.mxu0 0.0
    %1200 = vmatprep.subr.mxu0 0.0
    %1201 = vmatpush2.msra.mxu0 0.0
    %1202 = vmatprep.subr.mxu0 0.0
    %1203 = vmatpush2.msra.mxu0 0.0
    %1204 = vmatprep.subr.mxu0 0.0
    %1205 = vmatpush2.msra.mxu0 0.0
    %1206 = vmatprep.subr.mxu0 0.0
    %1207 = vmatpush2.msra.mxu0 0.0
    %1208 = vmatprep.subr.mxu0 0.0
    %1209 = vmatpush2.msra.mxu0 0.0
    %1210 = vmatprep.subr.mxu0 0.0
    %1211 = vmatpush2.msra.mxu0 0.0
    %1212 = vmatprep.subr.mxu0 0.0
    %1213 = vmatpush2.msra.mxu0 0.0
    %1214 = vmatprep.subr.mxu0 0.0
    %1215 = vmatpush2.msra.mxu0 0.0
    %1216 = vmatprep.subr.mxu0 0.0
    %1217 = vmatpush2.msra.mxu0 0.0
    %1218 = vmatprep.subr.mxu0 0.0
    %1219 = vmatpush2.msra.mxu0 0.0
    %1220 = vmatprep.subr.mxu0 0.0
    %1221 = vmatpush2.msra.mxu0 0.0
    %1222 = vmatprep.subr.mxu0 0.0
    %1223 = vmatpush2.msra.mxu0 0.0
    %1224 = vmatprep.subr.mxu0 0.0
    %1225 = vmatpush2.msra.mxu0 0.0
    %1226 = vmatprep.subr.mxu0 0.0
    %1227 = vmatpush2.msra.mxu0 0.0
    %1228 = vmatprep.mubr.f32.mxu0 0.0
    %1229 = vmatmul.mubr.f32.gmra.mxu0 %v1162
    %v1230 = vpop.f32.mrf.mxu0
    %v1231 = vadd.f32 0.0, %v1230
    %v1232 = vpop.f32.mrf.mxu0
    %1233 = vdwg.mxu0
    %v1234 = vadd.f32 %v1161, %v1231
    %v1235 = vxor.u32 %v1234, 2147483648
    %v1236 = vmul.f32 %v1235, 1.442695
    %v1237 = vpow.pop %v1236
    %v1238 = vadd.f32 %v1237, 1.0
    %v1239 = vrcp.pop %v1238
    %v1240 = vmul.f32 1.0, %v1239
    %v1241 = vtanh.pop %v1234
    %v1242 = vmul.f32 %v1240, %v1149
    %1244 = vrot.lane.b32.xlu0 %v1241, 32
    %v1245 = vpop.permute.xlu0 %1244
    %v1247 = vmul.f32 %v1240, %v1245
    %1249 = vrot.lane.b32.xlu0 %v1247, 32
    %v1250 = vpop.permute.xlu0 %1249
    %v1252 = vadd.f32 %v1242, %v1250
    %v1253 = vtanh.pop %v1252
    %1255 = vrot.lane.b32.xlu0 %v1253, 32
    %v1256 = vpop.permute.xlu0 %1255
    %v1258 = vmul.f32 %v1240, %v1256
    %1260 = vrot.lane.b32.xlu0 %v1258, 64
    %v1261 = vpop.permute.xlu0 %1260
    %1263 = vst.msk [vmem:[%s7 + $0x4] sm:$0x3] %vm202, %v1261
    %v1264 = vld [vmem:[#allocation2 + $0x6] sm:$0x3]
    %v1265 = vsel %vm205, %v1261, 0
    %1267 = vmatprep.subr.mxu0 0.0
    %1268 = vmatpush1.msra.mxu0 0.0
    %1269 = vmatprep.subr.mxu0 0.0
    %1270 = vmatpush1.msra.mxu0 0.0
    %1271 = vmatprep.subr.mxu0 0.0
    %1272 = vmatpush1.msra.mxu0 0.0
    %1273 = vmatprep.subr.mxu0 0.0
    %1274 = vmatpush1.msra.mxu0 0.0
    %1275 = vmatprep.subr.mxu0 0.0
    %1276 = vmatpush1.msra.mxu0 0.0
    %1277 = vmatprep.subr.mxu0 0.0
    %1278 = vmatpush1.msra.mxu0 0.0
    %1279 = vmatprep.subr.mxu0 0.0
    %1280 = vmatpush1.msra.mxu0 0.0
    %1281 = vmatprep.subr.mxu0 0.0
    %1282 = vmatpush1.msra.mxu0 0.0
    %1283 = vmatprep.subr.mxu0 0.0
    %1284 = vmatpush1.msra.mxu0 0.0
    %1285 = vmatprep.subr.mxu0 0.0
    %1286 = vmatpush1.msra.mxu0 0.0
    %1287 = vmatprep.subr.mxu0 0.0
    %1288 = vmatpush1.msra.mxu0 0.0
    %1289 = vmatprep.subr.mxu0 0.0
    %1290 = vmatpush1.msra.mxu0 0.0
    %1291 = vmatprep.subr.mxu0 0.0
    %1292 = vmatpush1.msra.mxu0 %v1029
    %1293 = vmatprep.subr.mxu0 0.0
    %1294 = vmatpush1.msra.mxu0 %v1028
    %1295 = vmatprep.subr.mxu0 0.0
    %1296 = vmatpush1.msra.mxu0 %v1027
    %1297 = vmatprep.subr.mxu0 0.0
    %1298 = vmatpush1.msra.mxu0 %v1026
    %1299 = vmatprep.subr.mxu0 0.0
    %1300 = vmatpush2.msra.mxu0 0.0
    %1301 = vmatprep.subr.mxu0 0.0
    %1302 = vmatpush2.msra.mxu0 0.0
    %1303 = vmatprep.subr.mxu0 0.0
    %1304 = vmatpush2.msra.mxu0 0.0
    %1305 = vmatprep.subr.mxu0 0.0
    %1306 = vmatpush2.msra.mxu0 0.0
    %1307 = vmatprep.subr.mxu0 0.0
    %1308 = vmatpush2.msra.mxu0 0.0
    %1309 = vmatprep.subr.mxu0 0.0
    %1310 = vmatpush2.msra.mxu0 0.0
    %1311 = vmatprep.subr.mxu0 0.0
    %1312 = vmatpush2.msra.mxu0 0.0
    %1313 = vmatprep.subr.mxu0 0.0
    %1314 = vmatpush2.msra.mxu0 0.0
    %1315 = vmatprep.subr.mxu0 0.0
    %1316 = vmatpush2.msra.mxu0 0.0
    %1317 = vmatprep.subr.mxu0 0.0
    %1318 = vmatpush2.msra.mxu0 0.0
    %1319 = vmatprep.subr.mxu0 0.0
    %1320 = vmatpush2.msra.mxu0 0.0
    %1321 = vmatprep.subr.mxu0 0.0
    %1322 = vmatpush2.msra.mxu0 0.0
    %1323 = vmatprep.subr.mxu0 0.0
    %1324 = vmatpush2.msra.mxu0 0.0
    %1325 = vmatprep.subr.mxu0 0.0
    %1326 = vmatpush2.msra.mxu0 0.0
    %1327 = vmatprep.subr.mxu0 0.0
    %1328 = vmatpush2.msra.mxu0 0.0
    %1329 = vmatprep.subr.mxu0 0.0
    %1330 = vmatpush2.msra.mxu0 0.0
    %1331 = vmatprep.mubr.f32.mxu0 0.0
    %1332 = vmatmul.mubr.f32.gmra.mxu0 %v1265
    %v1333 = vpop.f32.mrf.mxu0
    %v1334 = vadd.f32 0.0, %v1333
    %v1335 = vpop.f32.mrf.mxu0
    %1336 = vdwg.mxu0
    %v1337 = vadd.f32 %v1264, %v1334
    %v1338 = vxor.u32 %v1337, 2147483648
    %v1339 = vmul.f32 %v1338, 1.442695
    %v1340 = vpow.pop %v1339
    %v1341 = vadd.f32 %v1340, 1.0
    %v1342 = vrcp.pop %v1341
    %v1343 = vmul.f32 1.0, %v1342
    %v1344 = vtanh.pop %v1337
    %v1345 = vmul.f32 %v1343, %v1252
    %1347 = vrot.lane.b32.xlu0 %v1344, 32
    %v1348 = vpop.permute.xlu0 %1347
    %v1350 = vmul.f32 %v1343, %v1348
    %1352 = vrot.lane.b32.xlu0 %v1350, 32
    %v1353 = vpop.permute.xlu0 %1352
    %v1355 = vadd.f32 %v1345, %v1353
    %v1356 = vtanh.pop %v1355
    %1358 = vrot.lane.b32.xlu0 %v1356, 32
    %v1359 = vpop.permute.xlu0 %1358
    %v1361 = vmul.f32 %v1343, %v1359
    %1363 = vrot.lane.b32.xlu0 %v1361, 64
    %v1364 = vpop.permute.xlu0 %1363
    %1366 = vst.msk [vmem:[%s7 + $0x6] sm:$0x3] %vm202, %v1364
    %v1367 = vld [vmem:[#allocation2 + $0x8] sm:$0x3]
    %v1368 = vsel %vm205, %v1364, 0
    %1370 = vmatprep.subr.mxu0 0.0
    %1371 = vmatpush1.msra.mxu0 0.0
    %1372 = vmatprep.subr.mxu0 0.0
    %1373 = vmatpush1.msra.mxu0 0.0
    %1374 = vmatprep.subr.mxu0 0.0
    %1375 = vmatpush1.msra.mxu0 0.0
    %1376 = vmatprep.subr.mxu0 0.0
    %1377 = vmatpush1.msra.mxu0 0.0
    %1378 = vmatprep.subr.mxu0 0.0
    %1379 = vmatpush1.msra.mxu0 0.0
    %1380 = vmatprep.subr.mxu0 0.0
    %1381 = vmatpush1.msra.mxu0 0.0
    %1382 = vmatprep.subr.mxu0 0.0
    %1383 = vmatpush1.msra.mxu0 0.0
    %1384 = vmatprep.subr.mxu0 0.0
    %1385 = vmatpush1.msra.mxu0 0.0
    %1386 = vmatprep.subr.mxu0 0.0
    %1387 = vmatpush1.msra.mxu0 0.0
    %1388 = vmatprep.subr.mxu0 0.0
    %1389 = vmatpush1.msra.mxu0 0.0
    %1390 = vmatprep.subr.mxu0 0.0
    %1391 = vmatpush1.msra.mxu0 0.0
    %1392 = vmatprep.subr.mxu0 0.0
    %1393 = vmatpush1.msra.mxu0 0.0
    %1394 = vmatprep.subr.mxu0 0.0
    %1395 = vmatpush1.msra.mxu0 %v1029
    %1396 = vmatprep.subr.mxu0 0.0
    %1397 = vmatpush1.msra.mxu0 %v1028
    %1398 = vmatprep.subr.mxu0 0.0
    %1399 = vmatpush1.msra.mxu0 %v1027
    %1400 = vmatprep.subr.mxu0 0.0
    %1401 = vmatpush1.msra.mxu0 %v1026
    %1402 = vmatprep.subr.mxu0 0.0
    %1403 = vmatpush2.msra.mxu0 0.0
    %1404 = vmatprep.subr.mxu0 0.0
    %1405 = vmatpush2.msra.mxu0 0.0
    %1406 = vmatprep.subr.mxu0 0.0
    %1407 = vmatpush2.msra.mxu0 0.0
    %1408 = vmatprep.subr.mxu0 0.0
    %1409 = vmatpush2.msra.mxu0 0.0
    %1410 = vmatprep.subr.mxu0 0.0
    %1411 = vmatpush2.msra.mxu0 0.0
    %1412 = vmatprep.subr.mxu0 0.0
    %1413 = vmatpush2.msra.mxu0 0.0
    %1414 = vmatprep.subr.mxu0 0.0
    %1415 = vmatpush2.msra.mxu0 0.0
    %1416 = vmatprep.subr.mxu0 0.0
    %1417 = vmatpush2.msra.mxu0 0.0
    %1418 = vmatprep.subr.mxu0 0.0
    %1419 = vmatpush2.msra.mxu0 0.0
    %1420 = vmatprep.subr.mxu0 0.0
    %1421 = vmatpush2.msra.mxu0 0.0
    %1422 = vmatprep.subr.mxu0 0.0
    %1423 = vmatpush2.msra.mxu0 0.0
    %1424 = vmatprep.subr.mxu0 0.0
    %1425 = vmatpush2.msra.mxu0 0.0
    %1426 = vmatprep.subr.mxu0 0.0
    %1427 = vmatpush2.msra.mxu0 0.0
    %1428 = vmatprep.subr.mxu0 0.0
    %1429 = vmatpush2.msra.mxu0 0.0
    %1430 = vmatprep.subr.mxu0 0.0
    %1431 = vmatpush2.msra.mxu0 0.0
    %1432 = vmatprep.subr.mxu0 0.0
    %1433 = vmatpush2.msra.mxu0 0.0
    %1434 = vmatprep.mubr.f32.mxu0 0.0
    %1435 = vmatmul.mubr.f32.gmra.mxu0 %v1368
    %v1436 = vpop.f32.mrf.mxu0
    %v1437 = vadd.f32 0.0, %v1436
    %v1438 = vpop.f32.mrf.mxu0
    %1439 = vdwg.mxu0
    %v1440 = vadd.f32 %v1367, %v1437
    %v1441 = vxor.u32 %v1440, 2147483648
    %v1442 = vmul.f32 %v1441, 1.442695
    %v1443 = vpow.pop %v1442
    %v1444 = vadd.f32 %v1443, 1.0
    %v1445 = vrcp.pop %v1444
    %v1446 = vmul.f32 1.0, %v1445
    %v1447 = vtanh.pop %v1440
    %v1448 = vmul.f32 %v1446, %v1355
    %1450 = vrot.lane.b32.xlu0 %v1447, 32
    %v1451 = vpop.permute.xlu0 %1450
    %v1453 = vmul.f32 %v1446, %v1451
    %1455 = vrot.lane.b32.xlu0 %v1453, 32
    %v1456 = vpop.permute.xlu0 %1455
    %v1458 = vadd.f32 %v1448, %v1456
    %v1459 = vtanh.pop %v1458
    %1461 = vrot.lane.b32.xlu0 %v1459, 32
    %v1462 = vpop.permute.xlu0 %1461
    %v1464 = vmul.f32 %v1446, %v1462
    %1466 = vrot.lane.b32.xlu0 %v1464, 64
    %v1467 = vpop.permute.xlu0 %1466
    %1469 = vst.msk [vmem:[%s7 + $0x8] sm:$0x3] %vm202, %v1467
    %v1470 = vld [vmem:[#allocation2 + $0xa] sm:$0x3]
    %v1471 = vsel %vm205, %v1467, 0
    %1473 = vmatprep.subr.mxu0 0.0
    %1474 = vmatpush1.msra.mxu0 0.0
    %1475 = vmatprep.subr.mxu0 0.0
    %1476 = vmatpush1.msra.mxu0 0.0
    %1477 = vmatprep.subr.mxu0 0.0
    %1478 = vmatpush1.msra.mxu0 0.0
    %1479 = vmatprep.subr.mxu0 0.0
    %1480 = vmatpush1.msra.mxu0 0.0
    %1481 = vmatprep.subr.mxu0 0.0
    %1482 = vmatpush1.msra.mxu0 0.0
    %1483 = vmatprep.subr.mxu0 0.0
    %1484 = vmatpush1.msra.mxu0 0.0
    %1485 = vmatprep.subr.mxu0 0.0
    %1486 = vmatpush1.msra.mxu0 0.0
    %1487 = vmatprep.subr.mxu0 0.0
    %1488 = vmatpush1.msra.mxu0 0.0
    %1489 = vmatprep.subr.mxu0 0.0
    %1490 = vmatpush1.msra.mxu0 0.0
    %1491 = vmatprep.subr.mxu0 0.0
    %1492 = vmatpush1.msra.mxu0 0.0
    %1493 = vmatprep.subr.mxu0 0.0
    %1494 = vmatpush1.msra.mxu0 0.0
    %1495 = vmatprep.subr.mxu0 0.0
    %1496 = vmatpush1.msra.mxu0 0.0
    %1497 = vmatprep.subr.mxu0 0.0
    %1498 = vmatpush1.msra.mxu0 %v1029
    %1499 = vmatprep.subr.mxu0 0.0
    %1500 = vmatpush1.msra.mxu0 %v1028
    %1501 = vmatprep.subr.mxu0 0.0
    %1502 = vmatpush1.msra.mxu0 %v1027
    %1503 = vmatprep.subr.mxu0 0.0
    %1504 = vmatpush1.msra.mxu0 %v1026
    %1505 = vmatprep.subr.mxu0 0.0
    %1506 = vmatpush2.msra.mxu0 0.0
    %1507 = vmatprep.subr.mxu0 0.0
    %1508 = vmatpush2.msra.mxu0 0.0
    %1509 = vmatprep.subr.mxu0 0.0
    %1510 = vmatpush2.msra.mxu0 0.0
    %1511 = vmatprep.subr.mxu0 0.0
    %1512 = vmatpush2.msra.mxu0 0.0
    %1513 = vmatprep.subr.mxu0 0.0
    %1514 = vmatpush2.msra.mxu0 0.0
    %1515 = vmatprep.subr.mxu0 0.0
    %1516 = vmatpush2.msra.mxu0 0.0
    %1517 = vmatprep.subr.mxu0 0.0
    %1518 = vmatpush2.msra.mxu0 0.0
    %1519 = vmatprep.subr.mxu0 0.0
    %1520 = vmatpush2.msra.mxu0 0.0
    %1521 = vmatprep.subr.mxu0 0.0
    %1522 = vmatpush2.msra.mxu0 0.0
    %1523 = vmatprep.subr.mxu0 0.0
    %1524 = vmatpush2.msra.mxu0 0.0
    %1525 = vmatprep.subr.mxu0 0.0
    %1526 = vmatpush2.msra.mxu0 0.0
    %1527 = vmatprep.subr.mxu0 0.0
    %1528 = vmatpush2.msra.mxu0 0.0
    %1529 = vmatprep.subr.mxu0 0.0
    %1530 = vmatpush2.msra.mxu0 0.0
    %1531 = vmatprep.subr.mxu0 0.0
    %1532 = vmatpush2.msra.mxu0 0.0
    %1533 = vmatprep.subr.mxu0 0.0
    %1534 = vmatpush2.msra.mxu0 0.0
    %1535 = vmatprep.subr.mxu0 0.0
    %1536 = vmatpush2.msra.mxu0 0.0
    %1537 = vmatprep.mubr.f32.mxu0 0.0
    %1538 = vmatmul.mubr.f32.gmra.mxu0 %v1471
    %v1539 = vpop.f32.mrf.mxu0
    %v1540 = vadd.f32 0.0, %v1539
    %v1541 = vpop.f32.mrf.mxu0
    %1542 = vdwg.mxu0
    %v1543 = vadd.f32 %v1470, %v1540
    %v1544 = vxor.u32 %v1543, 2147483648
    %v1545 = vmul.f32 %v1544, 1.442695
    %v1546 = vpow.pop %v1545
    %v1547 = vadd.f32 %v1546, 1.0
    %v1548 = vrcp.pop %v1547
    %v1549 = vmul.f32 1.0, %v1548
    %v1550 = vtanh.pop %v1543
    %v1551 = vmul.f32 %v1549, %v1458
    %1553 = vrot.lane.b32.xlu0 %v1550, 32
    %v1554 = vpop.permute.xlu0 %1553
    %v1556 = vmul.f32 %v1549, %v1554
    %1558 = vrot.lane.b32.xlu0 %v1556, 32
    %v1559 = vpop.permute.xlu0 %1558
    %v1561 = vadd.f32 %v1551, %v1559
    %v1562 = vtanh.pop %v1561
    %1564 = vrot.lane.b32.xlu0 %v1562, 32
    %v1565 = vpop.permute.xlu0 %1564
    %v1567 = vmul.f32 %v1549, %v1565
    %1569 = vrot.lane.b32.xlu0 %v1567, 64
    %v1570 = vpop.permute.xlu0 %1569
    %1572 = vst.msk [vmem:[%s7 + $0xa] sm:$0x3] %vm202, %v1570
    %v1573 = vld [vmem:[#allocation2 + $0xc] sm:$0x3]
    %v1574 = vsel %vm205, %v1570, 0
    %1576 = vmatprep.subr.mxu0 0.0
    %1577 = vmatpush1.msra.mxu0 0.0
    %1578 = vmatprep.subr.mxu0 0.0
    %1579 = vmatpush1.msra.mxu0 0.0
    %1580 = vmatprep.subr.mxu0 0.0
    %1581 = vmatpush1.msra.mxu0 0.0
    %1582 = vmatprep.subr.mxu0 0.0
    %1583 = vmatpush1.msra.mxu0 0.0
    %1584 = vmatprep.subr.mxu0 0.0
    %1585 = vmatpush1.msra.mxu0 0.0
    %1586 = vmatprep.subr.mxu0 0.0
    %1587 = vmatpush1.msra.mxu0 0.0
    %1588 = vmatprep.subr.mxu0 0.0
    %1589 = vmatpush1.msra.mxu0 0.0
    %1590 = vmatprep.subr.mxu0 0.0
    %1591 = vmatpush1.msra.mxu0 0.0
    %1592 = vmatprep.subr.mxu0 0.0
    %1593 = vmatpush1.msra.mxu0 0.0
    %1594 = vmatprep.subr.mxu0 0.0
    %1595 = vmatpush1.msra.mxu0 0.0
    %1596 = vmatprep.subr.mxu0 0.0
    %1597 = vmatpush1.msra.mxu0 0.0
    %1598 = vmatprep.subr.mxu0 0.0
    %1599 = vmatpush1.msra.mxu0 0.0
    %1600 = vmatprep.subr.mxu0 0.0
    %1601 = vmatpush1.msra.mxu0 %v1029
    %1602 = vmatprep.subr.mxu0 0.0
    %1603 = vmatpush1.msra.mxu0 %v1028
    %1604 = vmatprep.subr.mxu0 0.0
    %1605 = vmatpush1.msra.mxu0 %v1027
    %1606 = vmatprep.subr.mxu0 0.0
    %1607 = vmatpush1.msra.mxu0 %v1026
    %1608 = vmatprep.subr.mxu0 0.0
    %1609 = vmatpush2.msra.mxu0 0.0
    %1610 = vmatprep.subr.mxu0 0.0
    %1611 = vmatpush2.msra.mxu0 0.0
    %1612 = vmatprep.subr.mxu0 0.0
    %1613 = vmatpush2.msra.mxu0 0.0
    %1614 = vmatprep.subr.mxu0 0.0
    %1615 = vmatpush2.msra.mxu0 0.0
    %1616 = vmatprep.subr.mxu0 0.0
    %1617 = vmatpush2.msra.mxu0 0.0
    %1618 = vmatprep.subr.mxu0 0.0
    %1619 = vmatpush2.msra.mxu0 0.0
    %1620 = vmatprep.subr.mxu0 0.0
    %1621 = vmatpush2.msra.mxu0 0.0
    %1622 = vmatprep.subr.mxu0 0.0
    %1623 = vmatpush2.msra.mxu0 0.0
    %1624 = vmatprep.subr.mxu0 0.0
    %1625 = vmatpush2.msra.mxu0 0.0
    %1626 = vmatprep.subr.mxu0 0.0
    %1627 = vmatpush2.msra.mxu0 0.0
    %1628 = vmatprep.subr.mxu0 0.0
    %1629 = vmatpush2.msra.mxu0 0.0
    %1630 = vmatprep.subr.mxu0 0.0
    %1631 = vmatpush2.msra.mxu0 0.0
    %1632 = vmatprep.subr.mxu0 0.0
    %1633 = vmatpush2.msra.mxu0 0.0
    %1634 = vmatprep.subr.mxu0 0.0
    %1635 = vmatpush2.msra.mxu0 0.0
    %1636 = vmatprep.subr.mxu0 0.0
    %1637 = vmatpush2.msra.mxu0 0.0
    %1638 = vmatprep.subr.mxu0 0.0
    %1639 = vmatpush2.msra.mxu0 0.0
    %1640 = vmatprep.mubr.f32.mxu0 0.0
    %1641 = vmatmul.mubr.f32.gmra.mxu0 %v1574
    %v1642 = vpop.f32.mrf.mxu0
    %v1643 = vadd.f32 0.0, %v1642
    %v1644 = vpop.f32.mrf.mxu0
    %1645 = vdwg.mxu0
    %v1646 = vadd.f32 %v1573, %v1643
    %v1647 = vxor.u32 %v1646, 2147483648
    %v1648 = vmul.f32 %v1647, 1.442695
    %v1649 = vpow.pop %v1648
    %v1650 = vadd.f32 %v1649, 1.0
    %v1651 = vrcp.pop %v1650
    %v1652 = vmul.f32 1.0, %v1651
    %v1653 = vtanh.pop %v1646
    %v1654 = vmul.f32 %v1652, %v1561
    %1656 = vrot.lane.b32.xlu0 %v1653, 32
    %v1657 = vpop.permute.xlu0 %1656
    %v1659 = vmul.f32 %v1652, %v1657
    %1661 = vrot.lane.b32.xlu0 %v1659, 32
    %v1662 = vpop.permute.xlu0 %1661
    %v1664 = vadd.f32 %v1654, %v1662
    %v1665 = vtanh.pop %v1664
    %1667 = vrot.lane.b32.xlu0 %v1665, 32
    %v1668 = vpop.permute.xlu0 %1667
    %v1670 = vmul.f32 %v1652, %v1668
    %1672 = vrot.lane.b32.xlu0 %v1670, 64
    %v1673 = vpop.permute.xlu0 %1672
    %1675 = vst.msk [vmem:[%s7 + $0xc] sm:$0x3] %vm202, %v1673
    %v1676 = vld [vmem:[#allocation2 + $0xe] sm:$0x3]
    %v1677 = vsel %vm205, %v1673, 0
    %1679 = vmatprep.subr.mxu0 0.0
    %1680 = vmatpush1.msra.mxu0 0.0
    %1681 = vmatprep.subr.mxu0 0.0
    %1682 = vmatpush1.msra.mxu0 0.0
    %1683 = vmatprep.subr.mxu0 0.0
    %1684 = vmatpush1.msra.mxu0 0.0
    %1685 = vmatprep.subr.mxu0 0.0
    %1686 = vmatpush1.msra.mxu0 0.0
    %1687 = vmatprep.subr.mxu0 0.0
    %1688 = vmatpush1.msra.mxu0 0.0
    %1689 = vmatprep.subr.mxu0 0.0
    %1690 = vmatpush1.msra.mxu0 0.0
    %1691 = vmatprep.subr.mxu0 0.0
    %1692 = vmatpush1.msra.mxu0 0.0
    %1693 = vmatprep.subr.mxu0 0.0
    %1694 = vmatpush1.msra.mxu0 0.0
    %1695 = vmatprep.subr.mxu0 0.0
    %1696 = vmatpush1.msra.mxu0 0.0
    %1697 = vmatprep.subr.mxu0 0.0
    %1698 = vmatpush1.msra.mxu0 0.0
    %1699 = vmatprep.subr.mxu0 0.0
    %1700 = vmatpush1.msra.mxu0 0.0
    %1701 = vmatprep.subr.mxu0 0.0
    %1702 = vmatpush1.msra.mxu0 0.0
    %1703 = vmatprep.subr.mxu0 0.0
    %1704 = vmatpush1.msra.mxu0 %v1029
    %1705 = vmatprep.subr.mxu0 0.0
    %1706 = vmatpush1.msra.mxu0 %v1028
    %1707 = vmatprep.subr.mxu0 0.0
    %1708 = vmatpush1.msra.mxu0 %v1027
    %1709 = vmatprep.subr.mxu0 0.0
    %1710 = vmatpush1.msra.mxu0 %v1026
    %1711 = vmatprep.subr.mxu0 0.0
    %1712 = vmatpush2.msra.mxu0 0.0
    %1713 = vmatprep.subr.mxu0 0.0
    %1714 = vmatpush2.msra.mxu0 0.0
    %1715 = vmatprep.subr.mxu0 0.0
    %1716 = vmatpush2.msra.mxu0 0.0
    %1717 = vmatprep.subr.mxu0 0.0
    %1718 = vmatpush2.msra.mxu0 0.0
    %1719 = vmatprep.subr.mxu0 0.0
    %1720 = vmatpush2.msra.mxu0 0.0
    %1721 = vmatprep.subr.mxu0 0.0
    %1722 = vmatpush2.msra.mxu0 0.0
    %1723 = vmatprep.subr.mxu0 0.0
    %1724 = vmatpush2.msra.mxu0 0.0
    %1725 = vmatprep.subr.mxu0 0.0
    %1726 = vmatpush2.msra.mxu0 0.0
    %1727 = vmatprep.subr.mxu0 0.0
    %1728 = vmatpush2.msra.mxu0 0.0
    %1729 = vmatprep.subr.mxu0 0.0
    %1730 = vmatpush2.msra.mxu0 0.0
    %1731 = vmatprep.subr.mxu0 0.0
    %1732 = vmatpush2.msra.mxu0 0.0
    %1733 = vmatprep.subr.mxu0 0.0
    %1734 = vmatpush2.msra.mxu0 0.0
    %1735 = vmatprep.subr.mxu0 0.0
    %1736 = vmatpush2.msra.mxu0 0.0
    %1737 = vmatprep.subr.mxu0 0.0
    %1738 = vmatpush2.msra.mxu0 0.0
    %1739 = vmatprep.subr.mxu0 0.0
    %1740 = vmatpush2.msra.mxu0 0.0
    %1741 = vmatprep.subr.mxu0 0.0
    %1742 = vmatpush2.msra.mxu0 0.0
    %1743 = vmatprep.mubr.f32.mxu0 0.0
    %1744 = vmatmul.mubr.f32.gmra.mxu0 %v1677
    %v1745 = vpop.f32.mrf.mxu0
    %v1746 = vadd.f32 0.0, %v1745
    %v1747 = vpop.f32.mrf.mxu0
    %1748 = vdwg.mxu0
    %v1749 = vadd.f32 %v1676, %v1746
    %v1750 = vxor.u32 %v1749, 2147483648
    %v1751 = vmul.f32 %v1750, 1.442695
    %v1752 = vpow.pop %v1751
    %v1753 = vadd.f32 %v1752, 1.0
    %v1754 = vrcp.pop %v1753
    %v1755 = vmul.f32 1.0, %v1754
    %v1756 = vtanh.pop %v1749
    %v1757 = vmul.f32 %v1755, %v1664
    %1759 = vrot.lane.b32.xlu0 %v1756, 32
    %v1760 = vpop.permute.xlu0 %1759
    %v1762 = vmul.f32 %v1755, %v1760
    %1764 = vrot.lane.b32.xlu0 %v1762, 32
    %v1765 = vpop.permute.xlu0 %1764
    %v1767 = vadd.f32 %v1757, %v1765
    %v1768 = vtanh.pop %v1767
    %1770 = vrot.lane.b32.xlu0 %v1768, 32
    %v1771 = vpop.permute.xlu0 %1770
    %v1773 = vmul.f32 %v1755, %v1771
    %1775 = vrot.lane.b32.xlu0 %v1773, 64
    %v1776 = vpop.permute.xlu0 %1775
    %1778 = vst.msk [vmem:[%s7 + $0xe] sm:$0x3] %vm202, %v1776
    // Predicated region
    $region46: #{clinical_processor_forward.1} parent=1 // pred_check
      _
    $region47: #{clinical_processor_forward.1} parent=1 // pred_check_branch
      %1780 = sbr.rel (0) target = $region49
    $region48: #{clinical_processor_forward.1} parent=1 // pred_region
      _
    $region49: #{clinical_processor_forward.1} parent=1 // pred_fallthru
      _
    // Predicated region
    $region50: #{clinical_processor_forward.1} parent=1 // pred_check
      _
    $region51: #{clinical_processor_forward.1} parent=1 // pred_check_branch
      %1782 = sbr.rel (0) target = $region53
    $region52: #{clinical_processor_forward.1} parent=1 // pred_region
      _
    $region53: #{clinical_processor_forward.1} parent=1 // pred_fallthru
      _
    %1783 = vsyncpa [#allocation5], 1
    %1784 = vsyncpa [#allocation7], 1
    %1785 = vsyncpa [#allocation10], 1

</llo_original>
